<compile_context>
chip_gen: v5e
topology: v5e:2x2
jax: 0.10.0
libtpu: 0.0.40
codegen_flags: <defaults>
</compile_context>

<pallas_src>
import functools

import numpy as np
import jax
import jax.numpy as jnp
from jax.experimental import pallas as pl
from jax.experimental.pallas import tpu as pltpu


# Tap order is ky-major / kx-minor, i.e. tap t = ky*3 + kx, (dy, dx) = (ky-1, kx-1).
_OFFSETS = tuple((dy, dx) for dy in (-1, 0, 1) for dx in (-1, 0, 1))


def _make_tap_masks(H, W):
    """(9, 1, H*W) float32 validity masks for each of the 9 conv taps (numpy const)."""
    yy, xx = np.meshgrid(np.arange(H), np.arange(W), indexing="ij")
    yy = yy.reshape(1, H * W)
    xx = xx.reshape(1, H * W)
    ms = []
    for dy, dx in _OFFSETS:
        valid = ((yy + dy >= 0) & (yy + dy < H) &
                 (xx + dx >= 0) & (xx + dx < W))
        ms.append(valid.astype(np.float32))
    return jnp.asarray(np.stack(ms, axis=0))


# ----------------------------------------------------------------------------
# Fused kernel: the whole DualNet forward for one batch element per grid step.
# ----------------------------------------------------------------------------
def _dualnet_kernel(dual_ref, g_ref, m_ref, w1_ref, b1_ref, a1_ref,
                    w2_ref, b2_ref, a2_ref, w3_ref, b3_ref,
                    o_ref, p1_ref, p2_ref, *, H, W):
    # dual_ref, g_ref : (1, 1, HW)      flattened-spatial inputs (lane-dense)
    # m_ref           : (9, 1, HW)      0/1 boundary masks per tap
    # w1_ref          : (32, 18)        [o, tap*2 + cin]
    # w2_ref          : (32, 288)       [o, tap*32 + cin]
    # w3_ref          : (9, 32, 1)      [tap, cin, 0]
    # b*_ref, a*_ref  : (32, 1) / (1, 1)
    # o_ref           : (1, 1, HW)
    # p1_ref, p2_ref  : VMEM im2col scratch (18, HW) / (288, HW)
    HW = H * W
    C2 = w2_ref.shape[0]                      # hidden channels (32)
    f32 = jnp.float32

    def tap(arr, t):
        # Spatial shift of arr (C, HW) by offset _OFFSETS[t], zero-padded at the
        # image boundary: lane roll on the XLU + precomputed 0/1 mask on the VPU.
        dy, dx = _OFFSETS[t]
        shift = (-(dy * W + dx)) % HW
        rolled = pltpu.roll(arr, shift, axis=1) if shift else arr
        return rolled * m_ref[t]              # m_ref[t]: (1, HW)

    d = dual_ref[0].astype(f32)               # (1, HW)
    gg = g_ref[0].astype(f32)                 # (1, HW)

    # ---- conv1 (2 -> 32): im2col patches (18, HW) in VMEM, one MXU matmul ----
    for t in range(9):
        p1_ref[2 * t: 2 * t + 1, :] = tap(d, t)
        p1_ref[2 * t + 1: 2 * t + 2, :] = tap(gg, t)
    h = jnp.dot(w1_ref[...], p1_ref[...], preferred_element_type=f32)   # (32, HW)
    h = h + b1_ref[...]
    h = jnp.where(h >= 0.0, h, a1_ref[...] * h)                         # PReLU

    # ---- conv2 (32 -> 32): im2col patches (288, HW), single deep-K matmul ----
    for t in range(9):
        p2_ref[C2 * t: C2 * (t + 1), :] = tap(h, t)
    h = jnp.dot(w2_ref[...], p2_ref[...], preferred_element_type=f32)   # (32, HW)
    h = h + b2_ref[...]
    h = jnp.where(h >= 0.0, h, a2_ref[...] * h)                         # PReLU

    # ---- conv3 (32 -> 1) on the VPU, fused with bias + residual add ----------
    acc = jnp.zeros((C2, HW), f32)
    for t in range(9):
        acc = acc + w3_ref[t] * tap(h, t)                               # (32,1)*(32,HW)
    out = jnp.sum(acc, axis=0, keepdims=True) + b3_ref[...]             # (1, HW)
    o_ref[0] = (d + out).astype(o_ref.dtype)


# ----------------------------------------------------------------------------
# Public forward (NCHW in / NCHW out, like the PyTorch module)
# ----------------------------------------------------------------------------
@jax.jit
def dualnet_forward(dual, g, params):
    """Fused Pallas implementation of DualNet.forward: dual + conv3(act2(conv2(act1(conv1(cat(dual,g))))))."""
    N, C, H, W = dual.shape
    assert C == 1 and g.shape == dual.shape
    HW = H * W
    C2 = params["w1"].shape[-1]               # 32 hidden channels

    dual_r = dual.reshape(N, 1, HW)
    g_r = g.reshape(N, 1, HW)

    # HWIO (3,3,Cin,Cout) -> (Cout, 9*Cin) with column index = tap*Cin + cin.
    w1r = jnp.transpose(params["w1"], (3, 0, 1, 2)).reshape(C2, 9 * 2)
    w2r = jnp.transpose(params["w2"], (3, 0, 1, 2)).reshape(C2, 9 * C2)
    w3r = params["w3"].reshape(9, C2, 1)      # [tap, cin, 0]
    b1 = params["b1"].reshape(C2, 1)
    a1 = params["a1"].reshape(C2, 1)
    b2 = params["b2"].reshape(C2, 1)
    a2 = params["a2"].reshape(C2, 1)
    b3 = params["b3"].reshape(1, 1)

    masks = _make_tap_masks(H, W)             # (9, 1, HW) compile-time constant

    kern = functools.partial(_dualnet_kernel, H=H, W=W)
    out = pl.pallas_call(
        kern,
        out_shape=jax.ShapeDtypeStruct((N, 1, HW), dual.dtype),
        grid=(N,),
        in_specs=[
            pl.BlockSpec((1, 1, HW), lambda n: (n, 0, 0)),     # dual
            pl.BlockSpec((1, 1, HW), lambda n: (n, 0, 0)),     # g
            pl.BlockSpec((9, 1, HW), lambda n: (0, 0, 0)),     # tap masks
            pl.BlockSpec((C2, 9 * 2), lambda n: (0, 0)),       # w1
            pl.BlockSpec((C2, 1), lambda n: (0, 0)),           # b1
            pl.BlockSpec((C2, 1), lambda n: (0, 0)),           # a1 (PReLU)
            pl.BlockSpec((C2, 9 * C2), lambda n: (0, 0)),      # w2
            pl.BlockSpec((C2, 1), lambda n: (0, 0)),           # b2
            pl.BlockSpec((C2, 1), lambda n: (0, 0)),           # a2 (PReLU)
            pl.BlockSpec((9, C2, 1), lambda n: (0, 0, 0)),     # w3
            pl.BlockSpec((1, 1), lambda n: (0, 0)),            # b3
        ],
        out_specs=pl.BlockSpec((1, 1, HW), lambda n: (n, 0, 0)),
        scratch_shapes=[
            pltpu.VMEM((9 * 2, HW), jnp.float32),              # conv1 im2col
            pltpu.VMEM((9 * C2, HW), jnp.float32),             # conv2 im2col
        ],
        compiler_params=pltpu.CompilerParams(
            dimension_semantics=("parallel",)),                # v7x: shard batch over 2 TCs
    )(dual_r, g_r, masks, w1r, b1, a1, w2r, b2, a2, w3r, b3)
    return out.reshape(N, 1, H, W)


# ----------------------------------------------------------------------------
# DualNet parameters (Xavier weights, zero biases, PReLU init=0.0 per module)
# ----------------------------------------------------------------------------
def _xavier_uniform(key, cin, cout):
    fan_in, fan_out = cin * 9, cout * 9
    bound = (6.0 / (fan_in + fan_out)) ** 0.5
    return jax.random.uniform(key, (3, 3, cin, cout), jnp.float32, -bound, bound)


def init_dualnet_params(key):
    k1, k2, k3 = jax.random.split(key, 3)
    return {
        "w1": _xavier_uniform(k1, 2, 32),
        "b1": jnp.zeros((32,), jnp.float32),
        "a1": jnp.zeros((32,), jnp.float32),   # nn.PReLU(num_parameters=32, init=0.0)
        "w2": _xavier_uniform(k2, 32, 32),
        "b2": jnp.zeros((32,), jnp.float32),
        "a2": jnp.zeros((32,), jnp.float32),
        "w3": _xavier_uniform(k3, 32, 1),
        "b3": jnp.zeros((1,), jnp.float32),
    }


# ----------------------------------------------------------------------------
# Pure-JAX reference (for correctness check)
# ----------------------------------------------------------------------------
def dualnet_reference(dual, g, params):
    x = jnp.concatenate([dual, g], axis=1)

    def conv(x, w, b):
        y = jax.lax.conv_general_dilated(
            x, w, window_strides=(1, 1), padding="SAME",
            dimension_numbers=("NCHW", "HWIO", "NCHW"))
        return y + b[None, :, None, None]

    def prelu(x, a):
        return jnp.where(x >= 0, x, a[None, :, None, None] * x)

    h = prelu(conv(x, params["w1"], params["b1"]), params["a1"])
    h = prelu(conv(h, params["w2"], params["b2"]), params["a2"])
    h = conv(h, params["w3"], params["b3"])
    return dual + h


if __name__ == "__main__":
    key = jax.random.PRNGKey(0)
    k_dual, k_g, k_params, k_a1, k_a2 = jax.random.split(key, 5)

    N, H, W = 2, 16, 16
    dual = jax.random.normal(k_dual, (N, 1, H, W), jnp.float32)
    g = jax.random.normal(k_g, (N, 1, H, W), jnp.float32)
    params = init_dualnet_params(k_params)
    # Use nonzero PReLU slopes in the self-test so the negative branch is actually
    # exercised (the module's own init is 0.0; forward semantics are unchanged).
    params["a1"] = jax.random.uniform(k_a1, (32,), jnp.float32, -0.25, 0.25)
    params["a2"] = jax.random.uniform(k_a2, (32,), jnp.float32, -0.25, 0.25)

    out = jax.block_until_ready(dualnet_forward(dual, g, params))
    ref = dualnet_reference(dual, g, params)

    assert out.shape == ref.shape == dual.shape
    assert jnp.allclose(out, ref, rtol=1e-4, atol=2e-5), (
        f"Pallas output mismatch, max abs err = {jnp.max(jnp.abs(out - ref))}")
    print("KERNEL_OK")
</pallas_src>

<mosaic_0001>
module attributes {stable_mosaic.version = 11 : i64} {
  func.func @_dualnet_kernel(%arg0: i32, %arg1: memref<1x1x256xf32, #tpu.memory_space<vmem>>, %arg2: memref<1x1x256xf32, #tpu.memory_space<vmem>>, %arg3: memref<9x1x256xf32, #tpu.memory_space<vmem>>, %arg4: memref<32x18xf32, #tpu.memory_space<vmem>>, %arg5: memref<32x1xf32, #tpu.memory_space<vmem>>, %arg6: memref<32x1xf32, #tpu.memory_space<vmem>>, %arg7: memref<32x288xf32, #tpu.memory_space<vmem>>, %arg8: memref<32x1xf32, #tpu.memory_space<vmem>>, %arg9: memref<32x1xf32, #tpu.memory_space<vmem>>, %arg10: memref<9x32x1xf32, #tpu.memory_space<vmem>>, %arg11: memref<1x1xf32, #tpu.memory_space<vmem>>, %arg12: memref<1x1x256xf32, #tpu.memory_space<vmem>>, %arg13: memref<18x256xf32, #tpu.memory_space<vmem>>, %arg14: memref<288x256xf32, #tpu.memory_space<vmem>>) attributes {dimension_semantics = [#tpu.dimension_semantics<parallel>], iteration_bounds = array<i64: 2>, scalar_prefetch = 0 : i64, scratch_operands = 2 : i64, tpu.core_type = #tpu.core_type<tc>, window_params = [{transform_indices = @transform_0, window_bounds = array<i64: 1, 1, 256>}, {transform_indices = @transform_1, window_bounds = array<i64: 1, 1, 256>}, {pipeline_mode = #tpu.pipeline_mode<synchronous>, transform_indices = @transform_2, window_bounds = array<i64: 9, 1, 256>}, {pipeline_mode = #tpu.pipeline_mode<synchronous>, transform_indices = @transform_3, window_bounds = array<i64: 32, 18>}, {pipeline_mode = #tpu.pipeline_mode<synchronous>, transform_indices = @transform_4, window_bounds = array<i64: 32, 1>}, {pipeline_mode = #tpu.pipeline_mode<synchronous>, transform_indices = @transform_5, window_bounds = array<i64: 32, 1>}, {pipeline_mode = #tpu.pipeline_mode<synchronous>, transform_indices = @transform_6, window_bounds = array<i64: 32, 288>}, {pipeline_mode = #tpu.pipeline_mode<synchronous>, transform_indices = @transform_7, window_bounds = array<i64: 32, 1>}, {pipeline_mode = #tpu.pipeline_mode<synchronous>, transform_indices = @transform_8, window_bounds = array<i64: 32, 1>}, {pipeline_mode = #tpu.pipeline_mode<synchronous>, transform_indices = @transform_9, window_bounds = array<i64: 9, 32, 1>}, {pipeline_mode = #tpu.pipeline_mode<synchronous>, transform_indices = @transform_10, window_bounds = array<i64: 1, 1>}, {transform_indices = @transform_11, window_bounds = array<i64: 1, 1, 256>}]} {
    %c0 = arith.constant 0 : index
    %c0_0 = arith.constant 0 : index
    %c0_1 = arith.constant 0 : index
    %0 = vector.load %arg1[%c0, %c0_0, %c0_1] : memref<1x1x256xf32, #tpu.memory_space<vmem>>, vector<1x1x256xf32>
    %1 = vector.shape_cast %0 : vector<1x1x256xf32> to vector<1x256xf32>
    %c0_2 = arith.constant 0 : index
    %c0_3 = arith.constant 0 : index
    %c0_4 = arith.constant 0 : index
    %2 = vector.load %arg2[%c0_2, %c0_3, %c0_4] : memref<1x1x256xf32, #tpu.memory_space<vmem>>, vector<1x1x256xf32>
    %3 = vector.shape_cast %2 : vector<1x1x256xf32> to vector<1x256xf32>
    %c17_i32 = arith.constant 17 : i32
    %4 = tpu.dynamic_rotate %1 by %c17_i32 dim 1 : vector<1x256xf32>, i32 -> vector<1x256xf32>
    %c0_5 = arith.constant 0 : index
    %c0_6 = arith.constant 0 : index
    %c0_7 = arith.constant 0 : index
    %5 = vector.load %arg3[%c0_5, %c0_6, %c0_7] : memref<9x1x256xf32, #tpu.memory_space<vmem>>, vector<1x1x256xf32>
    %6 = vector.shape_cast %5 : vector<1x1x256xf32> to vector<1x256xf32>
    %7 = arith.mulf %4, %6 : vector<1x256xf32>
    %c0_8 = arith.constant 0 : index
    %c0_9 = arith.constant 0 : index
    %8 = vector.load %arg13[%c0_8, %c0_9] : memref<18x256xf32, #tpu.memory_space<vmem>>, vector<1x256xf32>
    tpu.vector_store %arg13[%c0_8, %c0_9], %7 {strides = array<i32>} : memref<18x256xf32, #tpu.memory_space<vmem>>, vector<1x256xf32>,
    %c17_i32_10 = arith.constant 17 : i32
    %9 = tpu.dynamic_rotate %3 by %c17_i32_10 dim 1 : vector<1x256xf32>, i32 -> vector<1x256xf32>
    %c0_11 = arith.constant 0 : index
    %c0_12 = arith.constant 0 : index
    %c0_13 = arith.constant 0 : index
    %10 = vector.load %arg3[%c0_11, %c0_12, %c0_13] : memref<9x1x256xf32, #tpu.memory_space<vmem>>, vector<1x1x256xf32>
    %11 = vector.shape_cast %10 : vector<1x1x256xf32> to vector<1x256xf32>
    %12 = arith.mulf %9, %11 : vector<1x256xf32>
    %c1 = arith.constant 1 : index
    %c0_14 = arith.constant 0 : index
    %13 = vector.load %arg13[%c1, %c0_14] : memref<18x256xf32, #tpu.memory_space<vmem>>, vector<1x256xf32>
    tpu.vector_store %arg13[%c1, %c0_14], %12 {strides = array<i32>} : memref<18x256xf32, #tpu.memory_space<vmem>>, vector<1x256xf32>,
    %c16_i32 = arith.constant 16 : i32
    %14 = tpu.dynamic_rotate %1 by %c16_i32 dim 1 : vector<1x256xf32>, i32 -> vector<1x256xf32>
    %c1_15 = arith.constant 1 : index
    %c0_16 = arith.constant 0 : index
    %c0_17 = arith.constant 0 : index
    %15 = vector.load %arg3[%c1_15, %c0_16, %c0_17] : memref<9x1x256xf32, #tpu.memory_space<vmem>>, vector<1x1x256xf32>
    %16 = vector.shape_cast %15 : vector<1x1x256xf32> to vector<1x256xf32>
    %17 = arith.mulf %14, %16 : vector<1x256xf32>
    %c2 = arith.constant 2 : index
    %c0_18 = arith.constant 0 : index
    %18 = vector.load %arg13[%c2, %c0_18] : memref<18x256xf32, #tpu.memory_space<vmem>>, vector<1x256xf32>
    tpu.vector_store %arg13[%c2, %c0_18], %17 {strides = array<i32>} : memref<18x256xf32, #tpu.memory_space<vmem>>, vector<1x256xf32>,
    %c16_i32_19 = arith.constant 16 : i32
    %19 = tpu.dynamic_rotate %3 by %c16_i32_19 dim 1 : vector<1x256xf32>, i32 -> vector<1x256xf32>
    %c1_20 = arith.constant 1 : index
    %c0_21 = arith.constant 0 : index
    %c0_22 = arith.constant 0 : index
    %20 = vector.load %arg3[%c1_20, %c0_21, %c0_22] : memref<9x1x256xf32, #tpu.memory_space<vmem>>, vector<1x1x256xf32>
    %21 = vector.shape_cast %20 : vector<1x1x256xf32> to vector<1x256xf32>
    %22 = arith.mulf %19, %21 : vector<1x256xf32>
    %c3 = arith.constant 3 : index
    %c0_23 = arith.constant 0 : index
    %23 = vector.load %arg13[%c3, %c0_23] : memref<18x256xf32, #tpu.memory_space<vmem>>, vector<1x256xf32>
    tpu.vector_store %arg13[%c3, %c0_23], %22 {strides = array<i32>} : memref<18x256xf32, #tpu.memory_space<vmem>>, vector<1x256xf32>,
    %c15_i32 = arith.constant 15 : i32
    %24 = tpu.dynamic_rotate %1 by %c15_i32 dim 1 : vector<1x256xf32>, i32 -> vector<1x256xf32>
    %c2_24 = arith.constant 2 : index
    %c0_25 = arith.constant 0 : index
    %c0_26 = arith.constant 0 : index
    %25 = vector.load %arg3[%c2_24, %c0_25, %c0_26] : memref<9x1x256xf32, #tpu.memory_space<vmem>>, vector<1x1x256xf32>
    %26 = vector.shape_cast %25 : vector<1x1x256xf32> to vector<1x256xf32>
    %27 = arith.mulf %24, %26 : vector<1x256xf32>
    %c4 = arith.constant 4 : index
    %c0_27 = arith.constant 0 : index
    %28 = vector.load %arg13[%c4, %c0_27] : memref<18x256xf32, #tpu.memory_space<vmem>>, vector<1x256xf32>
    tpu.vector_store %arg13[%c4, %c0_27], %27 {strides = array<i32>} : memref<18x256xf32, #tpu.memory_space<vmem>>, vector<1x256xf32>,
    %c15_i32_28 = arith.constant 15 : i32
    %29 = tpu.dynamic_rotate %3 by %c15_i32_28 dim 1 : vector<1x256xf32>, i32 -> vector<1x256xf32>
    %c2_29 = arith.constant 2 : index
    %c0_30 = arith.constant 0 : index
    %c0_31 = arith.constant 0 : index
    %30 = vector.load %arg3[%c2_29, %c0_30, %c0_31] : memref<9x1x256xf32, #tpu.memory_space<vmem>>, vector<1x1x256xf32>
    %31 = vector.shape_cast %30 : vector<1x1x256xf32> to vector<1x256xf32>
    %32 = arith.mulf %29, %31 : vector<1x256xf32>
    %c5 = arith.constant 5 : index
    %c0_32 = arith.constant 0 : index
    %33 = vector.load %arg13[%c5, %c0_32] : memref<18x256xf32, #tpu.memory_space<vmem>>, vector<1x256xf32>
    tpu.vector_store %arg13[%c5, %c0_32], %32 {strides = array<i32>} : memref<18x256xf32, #tpu.memory_space<vmem>>, vector<1x256xf32>,
    %c1_i32 = arith.constant 1 : i32
    %34 = tpu.dynamic_rotate %1 by %c1_i32 dim 1 : vector<1x256xf32>, i32 -> vector<1x256xf32>
    %c3_33 = arith.constant 3 : index
    %c0_34 = arith.constant 0 : index
    %c0_35 = arith.constant 0 : index
    %35 = vector.load %arg3[%c3_33, %c0_34, %c0_35] : memref<9x1x256xf32, #tpu.memory_space<vmem>>, vector<1x1x256xf32>
    %36 = vector.shape_cast %35 : vector<1x1x256xf32> to vector<1x256xf32>
    %37 = arith.mulf %34, %36 : vector<1x256xf32>
    %c6 = arith.constant 6 : index
    %c0_36 = arith.constant 0 : index
    %38 = vector.load %arg13[%c6, %c0_36] : memref<18x256xf32, #tpu.memory_space<vmem>>, vector<1x256xf32>
    tpu.vector_store %arg13[%c6, %c0_36], %37 {strides = array<i32>} : memref<18x256xf32, #tpu.memory_space<vmem>>, vector<1x256xf32>,
    %c1_i32_37 = arith.constant 1 : i32
    %39 = tpu.dynamic_rotate %3 by %c1_i32_37 dim 1 : vector<1x256xf32>, i32 -> vector<1x256xf32>
    %c3_38 = arith.constant 3 : index
    %c0_39 = arith.constant 0 : index
    %c0_40 = arith.constant 0 : index
    %40 = vector.load %arg3[%c3_38, %c0_39, %c0_40] : memref<9x1x256xf32, #tpu.memory_space<vmem>>, vector<1x1x256xf32>
    %41 = vector.shape_cast %40 : vector<1x1x256xf32> to vector<1x256xf32>
    %42 = arith.mulf %39, %41 : vector<1x256xf32>
    %c7 = arith.constant 7 : index
    %c0_41 = arith.constant 0 : index
    %43 = vector.load %arg13[%c7, %c0_41] : memref<18x256xf32, #tpu.memory_space<vmem>>, vector<1x256xf32>
    tpu.vector_store %arg13[%c7, %c0_41], %42 {strides = array<i32>} : memref<18x256xf32, #tpu.memory_space<vmem>>, vector<1x256xf32>,
    %c4_42 = arith.constant 4 : index
    %c0_43 = arith.constant 0 : index
    %c0_44 = arith.constant 0 : index
    %44 = vector.load %arg3[%c4_42, %c0_43, %c0_44] : memref<9x1x256xf32, #tpu.memory_space<vmem>>, vector<1x1x256xf32>
    %45 = vector.shape_cast %44 : vector<1x1x256xf32> to vector<1x256xf32>
    %46 = arith.mulf %1, %45 : vector<1x256xf32>
    %c8 = arith.constant 8 : index
    %c0_45 = arith.constant 0 : index
    %47 = vector.load %arg13[%c8, %c0_45] : memref<18x256xf32, #tpu.memory_space<vmem>>, vector<1x256xf32>
    tpu.vector_store %arg13[%c8, %c0_45], %46 {strides = array<i32>} : memref<18x256xf32, #tpu.memory_space<vmem>>, vector<1x256xf32>,
    %c4_46 = arith.constant 4 : index
    %c0_47 = arith.constant 0 : index
    %c0_48 = arith.constant 0 : index
    %48 = vector.load %arg3[%c4_46, %c0_47, %c0_48] : memref<9x1x256xf32, #tpu.memory_space<vmem>>, vector<1x1x256xf32>
    %49 = vector.shape_cast %48 : vector<1x1x256xf32> to vector<1x256xf32>
    %50 = arith.mulf %3, %49 : vector<1x256xf32>
    %c9 = arith.constant 9 : index
    %c0_49 = arith.constant 0 : index
    %51 = vector.load %arg13[%c9, %c0_49] : memref<18x256xf32, #tpu.memory_space<vmem>>, vector<1x256xf32>
    tpu.vector_store %arg13[%c9, %c0_49], %50 {strides = array<i32>} : memref<18x256xf32, #tpu.memory_space<vmem>>, vector<1x256xf32>,
    %c255_i32 = arith.constant 255 : i32
    %52 = tpu.dynamic_rotate %1 by %c255_i32 dim 1 : vector<1x256xf32>, i32 -> vector<1x256xf32>
    %c5_50 = arith.constant 5 : index
    %c0_51 = arith.constant 0 : index
    %c0_52 = arith.constant 0 : index
    %53 = vector.load %arg3[%c5_50, %c0_51, %c0_52] : memref<9x1x256xf32, #tpu.memory_space<vmem>>, vector<1x1x256xf32>
    %54 = vector.shape_cast %53 : vector<1x1x256xf32> to vector<1x256xf32>
    %55 = arith.mulf %52, %54 : vector<1x256xf32>
    %c10 = arith.constant 10 : index
    %c0_53 = arith.constant 0 : index
    %56 = vector.load %arg13[%c10, %c0_53] : memref<18x256xf32, #tpu.memory_space<vmem>>, vector<1x256xf32>
    tpu.vector_store %arg13[%c10, %c0_53], %55 {strides = array<i32>} : memref<18x256xf32, #tpu.memory_space<vmem>>, vector<1x256xf32>,
    %c255_i32_54 = arith.constant 255 : i32
    %57 = tpu.dynamic_rotate %3 by %c255_i32_54 dim 1 : vector<1x256xf32>, i32 -> vector<1x256xf32>
    %c5_55 = arith.constant 5 : index
    %c0_56 = arith.constant 0 : index
    %c0_57 = arith.constant 0 : index
    %58 = vector.load %arg3[%c5_55, %c0_56, %c0_57] : memref<9x1x256xf32, #tpu.memory_space<vmem>>, vector<1x1x256xf32>
    %59 = vector.shape_cast %58 : vector<1x1x256xf32> to vector<1x256xf32>
    %60 = arith.mulf %57, %59 : vector<1x256xf32>
    %c11 = arith.constant 11 : index
    %c0_58 = arith.constant 0 : index
    %61 = vector.load %arg13[%c11, %c0_58] : memref<18x256xf32, #tpu.memory_space<vmem>>, vector<1x256xf32>
    tpu.vector_store %arg13[%c11, %c0_58], %60 {strides = array<i32>} : memref<18x256xf32, #tpu.memory_space<vmem>>, vector<1x256xf32>,
    %c241_i32 = arith.constant 241 : i32
    %62 = tpu.dynamic_rotate %1 by %c241_i32 dim 1 : vector<1x256xf32>, i32 -> vector<1x256xf32>
    %c6_59 = arith.constant 6 : index
    %c0_60 = arith.constant 0 : index
    %c0_61 = arith.constant 0 : index
    %63 = vector.load %arg3[%c6_59, %c0_60, %c0_61] : memref<9x1x256xf32, #tpu.memory_space<vmem>>, vector<1x1x256xf32>
    %64 = vector.shape_cast %63 : vector<1x1x256xf32> to vector<1x256xf32>
    %65 = arith.mulf %62, %64 : vector<1x256xf32>
    %c12 = arith.constant 12 : index
    %c0_62 = arith.constant 0 : index
    %66 = vector.load %arg13[%c12, %c0_62] : memref<18x256xf32, #tpu.memory_space<vmem>>, vector<1x256xf32>
    tpu.vector_store %arg13[%c12, %c0_62], %65 {strides = array<i32>} : memref<18x256xf32, #tpu.memory_space<vmem>>, vector<1x256xf32>,
    %c241_i32_63 = arith.constant 241 : i32
    %67 = tpu.dynamic_rotate %3 by %c241_i32_63 dim 1 : vector<1x256xf32>, i32 -> vector<1x256xf32>
    %c6_64 = arith.constant 6 : index
    %c0_65 = arith.constant 0 : index
    %c0_66 = arith.constant 0 : index
    %68 = vector.load %arg3[%c6_64, %c0_65, %c0_66] : memref<9x1x256xf32, #tpu.memory_space<vmem>>, vector<1x1x256xf32>
    %69 = vector.shape_cast %68 : vector<1x1x256xf32> to vector<1x256xf32>
    %70 = arith.mulf %67, %69 : vector<1x256xf32>
    %c13 = arith.constant 13 : index
    %c0_67 = arith.constant 0 : index
    %71 = vector.load %arg13[%c13, %c0_67] : memref<18x256xf32, #tpu.memory_space<vmem>>, vector<1x256xf32>
    tpu.vector_store %arg13[%c13, %c0_67], %70 {strides = array<i32>} : memref<18x256xf32, #tpu.memory_space<vmem>>, vector<1x256xf32>,
    %c240_i32 = arith.constant 240 : i32
    %72 = tpu.dynamic_rotate %1 by %c240_i32 dim 1 : vector<1x256xf32>, i32 -> vector<1x256xf32>
    %c7_68 = arith.constant 7 : index
    %c0_69 = arith.constant 0 : index
    %c0_70 = arith.constant 0 : index
    %73 = vector.load %arg3[%c7_68, %c0_69, %c0_70] : memref<9x1x256xf32, #tpu.memory_space<vmem>>, vector<1x1x256xf32>
    %74 = vector.shape_cast %73 : vector<1x1x256xf32> to vector<1x256xf32>
    %75 = arith.mulf %72, %74 : vector<1x256xf32>
    %c14 = arith.constant 14 : index
    %c0_71 = arith.constant 0 : index
    %76 = vector.load %arg13[%c14, %c0_71] : memref<18x256xf32, #tpu.memory_space<vmem>>, vector<1x256xf32>
    tpu.vector_store %arg13[%c14, %c0_71], %75 {strides = array<i32>} : memref<18x256xf32, #tpu.memory_space<vmem>>, vector<1x256xf32>,
    %c240_i32_72 = arith.constant 240 : i32
    %77 = tpu.dynamic_rotate %3 by %c240_i32_72 dim 1 : vector<1x256xf32>, i32 -> vector<1x256xf32>
    %c7_73 = arith.constant 7 : index
    %c0_74 = arith.constant 0 : index
    %c0_75 = arith.constant 0 : index
    %78 = vector.load %arg3[%c7_73, %c0_74, %c0_75] : memref<9x1x256xf32, #tpu.memory_space<vmem>>, vector<1x1x256xf32>
    %79 = vector.shape_cast %78 : vector<1x1x256xf32> to vector<1x256xf32>
    %80 = arith.mulf %77, %79 : vector<1x256xf32>
    %c15 = arith.constant 15 : index
    %c0_76 = arith.constant 0 : index
    %81 = vector.load %arg13[%c15, %c0_76] : memref<18x256xf32, #tpu.memory_space<vmem>>, vector<1x256xf32>
    tpu.vector_store %arg13[%c15, %c0_76], %80 {strides = array<i32>} : memref<18x256xf32, #tpu.memory_space<vmem>>, vector<1x256xf32>,
    %c239_i32 = arith.constant 239 : i32
    %82 = tpu.dynamic_rotate %1 by %c239_i32 dim 1 : vector<1x256xf32>, i32 -> vector<1x256xf32>
    %c8_77 = arith.constant 8 : index
    %c0_78 = arith.constant 0 : index
    %c0_79 = arith.constant 0 : index
    %83 = vector.load %arg3[%c8_77, %c0_78, %c0_79] : memref<9x1x256xf32, #tpu.memory_space<vmem>>, vector<1x1x256xf32>
    %84 = vector.shape_cast %83 : vector<1x1x256xf32> to vector<1x256xf32>
    %85 = arith.mulf %82, %84 : vector<1x256xf32>
    %c16 = arith.constant 16 : index
    %c0_80 = arith.constant 0 : index
    %86 = vector.load %arg13[%c16, %c0_80] : memref<18x256xf32, #tpu.memory_space<vmem>>, vector<1x256xf32>
    tpu.vector_store %arg13[%c16, %c0_80], %85 {strides = array<i32>} : memref<18x256xf32, #tpu.memory_space<vmem>>, vector<1x256xf32>,
    %c239_i32_81 = arith.constant 239 : i32
    %87 = tpu.dynamic_rotate %3 by %c239_i32_81 dim 1 : vector<1x256xf32>, i32 -> vector<1x256xf32>
    %c8_82 = arith.constant 8 : index
    %c0_83 = arith.constant 0 : index
    %c0_84 = arith.constant 0 : index
    %88 = vector.load %arg3[%c8_82, %c0_83, %c0_84] : memref<9x1x256xf32, #tpu.memory_space<vmem>>, vector<1x1x256xf32>
    %89 = vector.shape_cast %88 : vector<1x1x256xf32> to vector<1x256xf32>
    %90 = arith.mulf %87, %89 : vector<1x256xf32>
    %c17 = arith.constant 17 : index
    %c0_85 = arith.constant 0 : index
    %91 = vector.load %arg13[%c17, %c0_85] : memref<18x256xf32, #tpu.memory_space<vmem>>, vector<1x256xf32>
    tpu.vector_store %arg13[%c17, %c0_85], %90 {strides = array<i32>} : memref<18x256xf32, #tpu.memory_space<vmem>>, vector<1x256xf32>,
    %c0_86 = arith.constant 0 : index
    %c0_87 = arith.constant 0 : index
    %92 = vector.load %arg4[%c0_86, %c0_87] : memref<32x18xf32, #tpu.memory_space<vmem>>, vector<32x18xf32>
    %c0_88 = arith.constant 0 : index
    %c0_89 = arith.constant 0 : index
    %93 = vector.load %arg13[%c0_88, %c0_89] : memref<18x256xf32, #tpu.memory_space<vmem>>, vector<18x256xf32>
    %cst = arith.constant dense<0.000000e+00> : vector<32x256xf32>
    %94 = tpu.matmul %92, %93, %cst {dimension_numbers = #tpu.dot_dimension_numbers<[1], [0], [0], [1], [0, 0, 1, 1], [], []>} : vector<32x18xf32>, vector<18x256xf32>, vector<32x256xf32> -> vector<32x256xf32>
    %c0_90 = arith.constant 0 : index
    %c0_91 = arith.constant 0 : index
    %95 = vector.load %arg5[%c0_90, %c0_91] : memref<32x1xf32, #tpu.memory_space<vmem>>, vector<32x1xf32>
    %96 = vector.broadcast %95 : vector<32x1xf32> to vector<32x256xf32>
    %97 = arith.addf %94, %96 : vector<32x256xf32>
    %cst_92 = arith.constant 0.000000e+00 : f32
    %98 = vector.broadcast %cst_92 : f32 to vector<32x256xf32>
    %99 = arith.cmpf oge, %97, %98 : vector<32x256xf32>
    %c0_93 = arith.constant 0 : index
    %c0_94 = arith.constant 0 : index
    %100 = vector.load %arg6[%c0_93, %c0_94] : memref<32x1xf32, #tpu.memory_space<vmem>>, vector<32x1xf32>
    %101 = vector.broadcast %100 : vector<32x1xf32> to vector<32x256xf32>
    %102 = arith.mulf %101, %97 : vector<32x256xf32>
    %103 = arith.select %99, %97, %102 : vector<32x256xi1>, vector<32x256xf32>
    %c17_i32_95 = arith.constant 17 : i32
    %104 = tpu.dynamic_rotate %103 by %c17_i32_95 dim 1 : vector<32x256xf32>, i32 -> vector<32x256xf32>
    %c0_96 = arith.constant 0 : index
    %c0_97 = arith.constant 0 : index
    %c0_98 = arith.constant 0 : index
    %105 = vector.load %arg3[%c0_96, %c0_97, %c0_98] : memref<9x1x256xf32, #tpu.memory_space<vmem>>, vector<1x1x256xf32>
    %106 = vector.shape_cast %105 : vector<1x1x256xf32> to vector<1x256xf32>
    %107 = vector.broadcast %106 : vector<1x256xf32> to vector<32x256xf32>
    %108 = arith.mulf %104, %107 : vector<32x256xf32>
    %c0_99 = arith.constant 0 : index
    %c0_100 = arith.constant 0 : index
    %109 = vector.load %arg14[%c0_99, %c0_100] : memref<288x256xf32, #tpu.memory_space<vmem>>, vector<32x256xf32>
    tpu.vector_store %arg14[%c0_99, %c0_100], %108 {strides = array<i32>} : memref<288x256xf32, #tpu.memory_space<vmem>>, vector<32x256xf32>,
    %c16_i32_101 = arith.constant 16 : i32
    %110 = tpu.dynamic_rotate %103 by %c16_i32_101 dim 1 : vector<32x256xf32>, i32 -> vector<32x256xf32>
    %c1_102 = arith.constant 1 : index
    %c0_103 = arith.constant 0 : index
    %c0_104 = arith.constant 0 : index
    %111 = vector.load %arg3[%c1_102, %c0_103, %c0_104] : memref<9x1x256xf32, #tpu.memory_space<vmem>>, vector<1x1x256xf32>
    %112 = vector.shape_cast %111 : vector<1x1x256xf32> to vector<1x256xf32>
    %113 = vector.broadcast %112 : vector<1x256xf32> to vector<32x256xf32>
    %114 = arith.mulf %110, %113 : vector<32x256xf32>
    %c32 = arith.constant 32 : index
    %c0_105 = arith.constant 0 : index
    %115 = vector.load %arg14[%c32, %c0_105] : memref<288x256xf32, #tpu.memory_space<vmem>>, vector<32x256xf32>
    tpu.vector_store %arg14[%c32, %c0_105], %114 {strides = array<i32>} : memref<288x256xf32, #tpu.memory_space<vmem>>, vector<32x256xf32>,
    %c15_i32_106 = arith.constant 15 : i32
    %116 = tpu.dynamic_rotate %103 by %c15_i32_106 dim 1 : vector<32x256xf32>, i32 -> vector<32x256xf32>
    %c2_107 = arith.constant 2 : index
    %c0_108 = arith.constant 0 : index
    %c0_109 = arith.constant 0 : index
    %117 = vector.load %arg3[%c2_107, %c0_108, %c0_109] : memref<9x1x256xf32, #tpu.memory_space<vmem>>, vector<1x1x256xf32>
    %118 = vector.shape_cast %117 : vector<1x1x256xf32> to vector<1x256xf32>
    %119 = vector.broadcast %118 : vector<1x256xf32> to vector<32x256xf32>
    %120 = arith.mulf %116, %119 : vector<32x256xf32>
    %c64 = arith.constant 64 : index
    %c0_110 = arith.constant 0 : index
    %121 = vector.load %arg14[%c64, %c0_110] : memref<288x256xf32, #tpu.memory_space<vmem>>, vector<32x256xf32>
    tpu.vector_store %arg14[%c64, %c0_110], %120 {strides = array<i32>} : memref<288x256xf32, #tpu.memory_space<vmem>>, vector<32x256xf32>,
    %c1_i32_111 = arith.constant 1 : i32
    %122 = tpu.dynamic_rotate %103 by %c1_i32_111 dim 1 : vector<32x256xf32>, i32 -> vector<32x256xf32>
    %c3_112 = arith.constant 3 : index
    %c0_113 = arith.constant 0 : index
    %c0_114 = arith.constant 0 : index
    %123 = vector.load %arg3[%c3_112, %c0_113, %c0_114] : memref<9x1x256xf32, #tpu.memory_space<vmem>>, vector<1x1x256xf32>
    %124 = vector.shape_cast %123 : vector<1x1x256xf32> to vector<1x256xf32>
    %125 = vector.broadcast %124 : vector<1x256xf32> to vector<32x256xf32>
    %126 = arith.mulf %122, %125 : vector<32x256xf32>
    %c96 = arith.constant 96 : index
    %c0_115 = arith.constant 0 : index
    %127 = vector.load %arg14[%c96, %c0_115] : memref<288x256xf32, #tpu.memory_space<vmem>>, vector<32x256xf32>
    tpu.vector_store %arg14[%c96, %c0_115], %126 {strides = array<i32>} : memref<288x256xf32, #tpu.memory_space<vmem>>, vector<32x256xf32>,
    %c4_116 = arith.constant 4 : index
    %c0_117 = arith.constant 0 : index
    %c0_118 = arith.constant 0 : index
    %128 = vector.load %arg3[%c4_116, %c0_117, %c0_118] : memref<9x1x256xf32, #tpu.memory_space<vmem>>, vector<1x1x256xf32>
    %129 = vector.shape_cast %128 : vector<1x1x256xf32> to vector<1x256xf32>
    %130 = vector.broadcast %129 : vector<1x256xf32> to vector<32x256xf32>
    %131 = arith.mulf %103, %130 : vector<32x256xf32>
    %c128 = arith.constant 128 : index
    %c0_119 = arith.constant 0 : index
    %132 = vector.load %arg14[%c128, %c0_119] : memref<288x256xf32, #tpu.memory_space<vmem>>, vector<32x256xf32>
    tpu.vector_store %arg14[%c128, %c0_119], %131 {strides = array<i32>} : memref<288x256xf32, #tpu.memory_space<vmem>>, vector<32x256xf32>,
    %c255_i32_120 = arith.constant 255 : i32
    %133 = tpu.dynamic_rotate %103 by %c255_i32_120 dim 1 : vector<32x256xf32>, i32 -> vector<32x256xf32>
    %c5_121 = arith.constant 5 : index
    %c0_122 = arith.constant 0 : index
    %c0_123 = arith.constant 0 : index
    %134 = vector.load %arg3[%c5_121, %c0_122, %c0_123] : memref<9x1x256xf32, #tpu.memory_space<vmem>>, vector<1x1x256xf32>
    %135 = vector.shape_cast %134 : vector<1x1x256xf32> to vector<1x256xf32>
    %136 = vector.broadcast %135 : vector<1x256xf32> to vector<32x256xf32>
    %137 = arith.mulf %133, %136 : vector<32x256xf32>
    %c160 = arith.constant 160 : index
    %c0_124 = arith.constant 0 : index
    %138 = vector.load %arg14[%c160, %c0_124] : memref<288x256xf32, #tpu.memory_space<vmem>>, vector<32x256xf32>
    tpu.vector_store %arg14[%c160, %c0_124], %137 {strides = array<i32>} : memref<288x256xf32, #tpu.memory_space<vmem>>, vector<32x256xf32>,
    %c241_i32_125 = arith.constant 241 : i32
    %139 = tpu.dynamic_rotate %103 by %c241_i32_125 dim 1 : vector<32x256xf32>, i32 -> vector<32x256xf32>
    %c6_126 = arith.constant 6 : index
    %c0_127 = arith.constant 0 : index
    %c0_128 = arith.constant 0 : index
    %140 = vector.load %arg3[%c6_126, %c0_127, %c0_128] : memref<9x1x256xf32, #tpu.memory_space<vmem>>, vector<1x1x256xf32>
    %141 = vector.shape_cast %140 : vector<1x1x256xf32> to vector<1x256xf32>
    %142 = vector.broadcast %141 : vector<1x256xf32> to vector<32x256xf32>
    %143 = arith.mulf %139, %142 : vector<32x256xf32>
    %c192 = arith.constant 192 : index
    %c0_129 = arith.constant 0 : index
    %144 = vector.load %arg14[%c192, %c0_129] : memref<288x256xf32, #tpu.memory_space<vmem>>, vector<32x256xf32>
    tpu.vector_store %arg14[%c192, %c0_129], %143 {strides = array<i32>} : memref<288x256xf32, #tpu.memory_space<vmem>>, vector<32x256xf32>,
    %c240_i32_130 = arith.constant 240 : i32
    %145 = tpu.dynamic_rotate %103 by %c240_i32_130 dim 1 : vector<32x256xf32>, i32 -> vector<32x256xf32>
    %c7_131 = arith.constant 7 : index
    %c0_132 = arith.constant 0 : index
    %c0_133 = arith.constant 0 : index
    %146 = vector.load %arg3[%c7_131, %c0_132, %c0_133] : memref<9x1x256xf32, #tpu.memory_space<vmem>>, vector<1x1x256xf32>
    %147 = vector.shape_cast %146 : vector<1x1x256xf32> to vector<1x256xf32>
    %148 = vector.broadcast %147 : vector<1x256xf32> to vector<32x256xf32>
    %149 = arith.mulf %145, %148 : vector<32x256xf32>
    %c224 = arith.constant 224 : index
    %c0_134 = arith.constant 0 : index
    %150 = vector.load %arg14[%c224, %c0_134] : memref<288x256xf32, #tpu.memory_space<vmem>>, vector<32x256xf32>
    tpu.vector_store %arg14[%c224, %c0_134], %149 {strides = array<i32>} : memref<288x256xf32, #tpu.memory_space<vmem>>, vector<32x256xf32>,
    %c239_i32_135 = arith.constant 239 : i32
    %151 = tpu.dynamic_rotate %103 by %c239_i32_135 dim 1 : vector<32x256xf32>, i32 -> vector<32x256xf32>
    %c8_136 = arith.constant 8 : index
    %c0_137 = arith.constant 0 : index
    %c0_138 = arith.constant 0 : index
    %152 = vector.load %arg3[%c8_136, %c0_137, %c0_138] : memref<9x1x256xf32, #tpu.memory_space<vmem>>, vector<1x1x256xf32>
    %153 = vector.shape_cast %152 : vector<1x1x256xf32> to vector<1x256xf32>
    %154 = vector.broadcast %153 : vector<1x256xf32> to vector<32x256xf32>
    %155 = arith.mulf %151, %154 : vector<32x256xf32>
    %c256 = arith.constant 256 : index
    %c0_139 = arith.constant 0 : index
    %156 = vector.load %arg14[%c256, %c0_139] : memref<288x256xf32, #tpu.memory_space<vmem>>, vector<32x256xf32>
    tpu.vector_store %arg14[%c256, %c0_139], %155 {strides = array<i32>} : memref<288x256xf32, #tpu.memory_space<vmem>>, vector<32x256xf32>,
    %c0_140 = arith.constant 0 : index
    %c0_141 = arith.constant 0 : index
    %157 = vector.load %arg7[%c0_140, %c0_141] : memref<32x288xf32, #tpu.memory_space<vmem>>, vector<32x288xf32>
    %c0_142 = arith.constant 0 : index
    %c0_143 = arith.constant 0 : index
    %158 = vector.load %arg14[%c0_142, %c0_143] : memref<288x256xf32, #tpu.memory_space<vmem>>, vector<288x256xf32>
    %cst_144 = arith.constant dense<0.000000e+00> : vector<32x256xf32>
    %159 = tpu.matmul %157, %158, %cst_144 {dimension_numbers = #tpu.dot_dimension_numbers<[1], [0], [0], [1], [0, 0, 1, 1], [], []>} : vector<32x288xf32>, vector<288x256xf32>, vector<32x256xf32> -> vector<32x256xf32>
    %c0_145 = arith.constant 0 : index
    %c0_146 = arith.constant 0 : index
    %160 = vector.load %arg8[%c0_145, %c0_146] : memref<32x1xf32, #tpu.memory_space<vmem>>, vector<32x1xf32>
    %161 = vector.broadcast %160 : vector<32x1xf32> to vector<32x256xf32>
    %162 = arith.addf %159, %161 : vector<32x256xf32>
    %cst_147 = arith.constant 0.000000e+00 : f32
    %163 = vector.broadcast %cst_147 : f32 to vector<32x256xf32>
    %164 = arith.cmpf oge, %162, %163 : vector<32x256xf32>
    %c0_148 = arith.constant 0 : index
    %c0_149 = arith.constant 0 : index
    %165 = vector.load %arg9[%c0_148, %c0_149] : memref<32x1xf32, #tpu.memory_space<vmem>>, vector<32x1xf32>
    %166 = vector.broadcast %165 : vector<32x1xf32> to vector<32x256xf32>
    %167 = arith.mulf %166, %162 : vector<32x256xf32>
    %168 = arith.select %164, %162, %167 : vector<32x256xi1>, vector<32x256xf32>
    %cst_150 = arith.constant 0.000000e+00 : f32
    %169 = vector.broadcast %cst_150 : f32 to vector<32x256xf32>
    %c0_151 = arith.constant 0 : index
    %c0_152 = arith.constant 0 : index
    %c0_153 = arith.constant 0 : index
    %170 = vector.load %arg10[%c0_151, %c0_152, %c0_153] : memref<9x32x1xf32, #tpu.memory_space<vmem>>, vector<1x32x1xf32>
    %171 = vector.shape_cast %170 : vector<1x32x1xf32> to vector<32x1xf32>
    %c17_i32_154 = arith.constant 17 : i32
    %172 = tpu.dynamic_rotate %168 by %c17_i32_154 dim 1 : vector<32x256xf32>, i32 -> vector<32x256xf32>
    %c0_155 = arith.constant 0 : index
    %c0_156 = arith.constant 0 : index
    %c0_157 = arith.constant 0 : index
    %173 = vector.load %arg3[%c0_155, %c0_156, %c0_157] : memref<9x1x256xf32, #tpu.memory_space<vmem>>, vector<1x1x256xf32>
    %174 = vector.shape_cast %173 : vector<1x1x256xf32> to vector<1x256xf32>
    %175 = vector.broadcast %174 : vector<1x256xf32> to vector<32x256xf32>
    %176 = arith.mulf %172, %175 : vector<32x256xf32>
    %177 = vector.broadcast %171 : vector<32x1xf32> to vector<32x256xf32>
    %178 = arith.mulf %177, %176 : vector<32x256xf32>
    %179 = arith.addf %169, %178 : vector<32x256xf32>
    %c1_158 = arith.constant 1 : index
    %c0_159 = arith.constant 0 : index
    %c0_160 = arith.constant 0 : index
    %180 = vector.load %arg10[%c1_158, %c0_159, %c0_160] : memref<9x32x1xf32, #tpu.memory_space<vmem>>, vector<1x32x1xf32>
    %181 = vector.shape_cast %180 : vector<1x32x1xf32> to vector<32x1xf32>
    %c16_i32_161 = arith.constant 16 : i32
    %182 = tpu.dynamic_rotate %168 by %c16_i32_161 dim 1 : vector<32x256xf32>, i32 -> vector<32x256xf32>
    %c1_162 = arith.constant 1 : index
    %c0_163 = arith.constant 0 : index
    %c0_164 = arith.constant 0 : index
    %183 = vector.load %arg3[%c1_162, %c0_163, %c0_164] : memref<9x1x256xf32, #tpu.memory_space<vmem>>, vector<1x1x256xf32>
    %184 = vector.shape_cast %183 : vector<1x1x256xf32> to vector<1x256xf32>
    %185 = vector.broadcast %184 : vector<1x256xf32> to vector<32x256xf32>
    %186 = arith.mulf %182, %185 : vector<32x256xf32>
    %187 = vector.broadcast %181 : vector<32x1xf32> to vector<32x256xf32>
    %188 = arith.mulf %187, %186 : vector<32x256xf32>
    %189 = arith.addf %179, %188 : vector<32x256xf32>
    %c2_165 = arith.constant 2 : index
    %c0_166 = arith.constant 0 : index
    %c0_167 = arith.constant 0 : index
    %190 = vector.load %arg10[%c2_165, %c0_166, %c0_167] : memref<9x32x1xf32, #tpu.memory_space<vmem>>, vector<1x32x1xf32>
    %191 = vector.shape_cast %190 : vector<1x32x1xf32> to vector<32x1xf32>
    %c15_i32_168 = arith.constant 15 : i32
    %192 = tpu.dynamic_rotate %168 by %c15_i32_168 dim 1 : vector<32x256xf32>, i32 -> vector<32x256xf32>
    %c2_169 = arith.constant 2 : index
    %c0_170 = arith.constant 0 : index
    %c0_171 = arith.constant 0 : index
    %193 = vector.load %arg3[%c2_169, %c0_170, %c0_171] : memref<9x1x256xf32, #tpu.memory_space<vmem>>, vector<1x1x256xf32>
    %194 = vector.shape_cast %193 : vector<1x1x256xf32> to vector<1x256xf32>
    %195 = vector.broadcast %194 : vector<1x256xf32> to vector<32x256xf32>
    %196 = arith.mulf %192, %195 : vector<32x256xf32>
    %197 = vector.broadcast %191 : vector<32x1xf32> to vector<32x256xf32>
    %198 = arith.mulf %197, %196 : vector<32x256xf32>
    %199 = arith.addf %189, %198 : vector<32x256xf32>
    %c3_172 = arith.constant 3 : index
    %c0_173 = arith.constant 0 : index
    %c0_174 = arith.constant 0 : index
    %200 = vector.load %arg10[%c3_172, %c0_173, %c0_174] : memref<9x32x1xf32, #tpu.memory_space<vmem>>, vector<1x32x1xf32>
    %201 = vector.shape_cast %200 : vector<1x32x1xf32> to vector<32x1xf32>
    %c1_i32_175 = arith.constant 1 : i32
    %202 = tpu.dynamic_rotate %168 by %c1_i32_175 dim 1 : vector<32x256xf32>, i32 -> vector<32x256xf32>
    %c3_176 = arith.constant 3 : index
    %c0_177 = arith.constant 0 : index
    %c0_178 = arith.constant 0 : index
    %203 = vector.load %arg3[%c3_176, %c0_177, %c0_178] : memref<9x1x256xf32, #tpu.memory_space<vmem>>, vector<1x1x256xf32>
    %204 = vector.shape_cast %203 : vector<1x1x256xf32> to vector<1x256xf32>
    %205 = vector.broadcast %204 : vector<1x256xf32> to vector<32x256xf32>
    %206 = arith.mulf %202, %205 : vector<32x256xf32>
    %207 = vector.broadcast %201 : vector<32x1xf32> to vector<32x256xf32>
    %208 = arith.mulf %207, %206 : vector<32x256xf32>
    %209 = arith.addf %199, %208 : vector<32x256xf32>
    %c4_179 = arith.constant 4 : index
    %c0_180 = arith.constant 0 : index
    %c0_181 = arith.constant 0 : index
    %210 = vector.load %arg10[%c4_179, %c0_180, %c0_181] : memref<9x32x1xf32, #tpu.memory_space<vmem>>, vector<1x32x1xf32>
    %211 = vector.shape_cast %210 : vector<1x32x1xf32> to vector<32x1xf32>
    %c4_182 = arith.constant 4 : index
    %c0_183 = arith.constant 0 : index
    %c0_184 = arith.constant 0 : index
    %212 = vector.load %arg3[%c4_182, %c0_183, %c0_184] : memref<9x1x256xf32, #tpu.memory_space<vmem>>, vector<1x1x256xf32>
    %213 = vector.shape_cast %212 : vector<1x1x256xf32> to vector<1x256xf32>
    %214 = vector.broadcast %213 : vector<1x256xf32> to vector<32x256xf32>
    %215 = arith.mulf %168, %214 : vector<32x256xf32>
    %216 = vector.broadcast %211 : vector<32x1xf32> to vector<32x256xf32>
    %217 = arith.mulf %216, %215 : vector<32x256xf32>
    %218 = arith.addf %209, %217 : vector<32x256xf32>
    %c5_185 = arith.constant 5 : index
    %c0_186 = arith.constant 0 : index
    %c0_187 = arith.constant 0 : index
    %219 = vector.load %arg10[%c5_185, %c0_186, %c0_187] : memref<9x32x1xf32, #tpu.memory_space<vmem>>, vector<1x32x1xf32>
    %220 = vector.shape_cast %219 : vector<1x32x1xf32> to vector<32x1xf32>
    %c255_i32_188 = arith.constant 255 : i32
    %221 = tpu.dynamic_rotate %168 by %c255_i32_188 dim 1 : vector<32x256xf32>, i32 -> vector<32x256xf32>
    %c5_189 = arith.constant 5 : index
    %c0_190 = arith.constant 0 : index
    %c0_191 = arith.constant 0 : index
    %222 = vector.load %arg3[%c5_189, %c0_190, %c0_191] : memref<9x1x256xf32, #tpu.memory_space<vmem>>, vector<1x1x256xf32>
    %223 = vector.shape_cast %222 : vector<1x1x256xf32> to vector<1x256xf32>
    %224 = vector.broadcast %223 : vector<1x256xf32> to vector<32x256xf32>
    %225 = arith.mulf %221, %224 : vector<32x256xf32>
    %226 = vector.broadcast %220 : vector<32x1xf32> to vector<32x256xf32>
    %227 = arith.mulf %226, %225 : vector<32x256xf32>
    %228 = arith.addf %218, %227 : vector<32x256xf32>
    %c6_192 = arith.constant 6 : index
    %c0_193 = arith.constant 0 : index
    %c0_194 = arith.constant 0 : index
    %229 = vector.load %arg10[%c6_192, %c0_193, %c0_194] : memref<9x32x1xf32, #tpu.memory_space<vmem>>, vector<1x32x1xf32>
    %230 = vector.shape_cast %229 : vector<1x32x1xf32> to vector<32x1xf32>
    %c241_i32_195 = arith.constant 241 : i32
    %231 = tpu.dynamic_rotate %168 by %c241_i32_195 dim 1 : vector<32x256xf32>, i32 -> vector<32x256xf32>
    %c6_196 = arith.constant 6 : index
    %c0_197 = arith.constant 0 : index
    %c0_198 = arith.constant 0 : index
    %232 = vector.load %arg3[%c6_196, %c0_197, %c0_198] : memref<9x1x256xf32, #tpu.memory_space<vmem>>, vector<1x1x256xf32>
    %233 = vector.shape_cast %232 : vector<1x1x256xf32> to vector<1x256xf32>
    %234 = vector.broadcast %233 : vector<1x256xf32> to vector<32x256xf32>
    %235 = arith.mulf %231, %234 : vector<32x256xf32>
    %236 = vector.broadcast %230 : vector<32x1xf32> to vector<32x256xf32>
    %237 = arith.mulf %236, %235 : vector<32x256xf32>
    %238 = arith.addf %228, %237 : vector<32x256xf32>
    %c7_199 = arith.constant 7 : index
    %c0_200 = arith.constant 0 : index
    %c0_201 = arith.constant 0 : index
    %239 = vector.load %arg10[%c7_199, %c0_200, %c0_201] : memref<9x32x1xf32, #tpu.memory_space<vmem>>, vector<1x32x1xf32>
    %240 = vector.shape_cast %239 : vector<1x32x1xf32> to vector<32x1xf32>
    %c240_i32_202 = arith.constant 240 : i32
    %241 = tpu.dynamic_rotate %168 by %c240_i32_202 dim 1 : vector<32x256xf32>, i32 -> vector<32x256xf32>
    %c7_203 = arith.constant 7 : index
    %c0_204 = arith.constant 0 : index
    %c0_205 = arith.constant 0 : index
    %242 = vector.load %arg3[%c7_203, %c0_204, %c0_205] : memref<9x1x256xf32, #tpu.memory_space<vmem>>, vector<1x1x256xf32>
    %243 = vector.shape_cast %242 : vector<1x1x256xf32> to vector<1x256xf32>
    %244 = vector.broadcast %243 : vector<1x256xf32> to vector<32x256xf32>
    %245 = arith.mulf %241, %244 : vector<32x256xf32>
    %246 = vector.broadcast %240 : vector<32x1xf32> to vector<32x256xf32>
    %247 = arith.mulf %246, %245 : vector<32x256xf32>
    %248 = arith.addf %238, %247 : vector<32x256xf32>
    %c8_206 = arith.constant 8 : index
    %c0_207 = arith.constant 0 : index
    %c0_208 = arith.constant 0 : index
    %249 = vector.load %arg10[%c8_206, %c0_207, %c0_208] : memref<9x32x1xf32, #tpu.memory_space<vmem>>, vector<1x32x1xf32>
    %250 = vector.shape_cast %249 : vector<1x32x1xf32> to vector<32x1xf32>
    %c239_i32_209 = arith.constant 239 : i32
    %251 = tpu.dynamic_rotate %168 by %c239_i32_209 dim 1 : vector<32x256xf32>, i32 -> vector<32x256xf32>
    %c8_210 = arith.constant 8 : index
    %c0_211 = arith.constant 0 : index
    %c0_212 = arith.constant 0 : index
    %252 = vector.load %arg3[%c8_210, %c0_211, %c0_212] : memref<9x1x256xf32, #tpu.memory_space<vmem>>, vector<1x1x256xf32>
    %253 = vector.shape_cast %252 : vector<1x1x256xf32> to vector<1x256xf32>
    %254 = vector.broadcast %253 : vector<1x256xf32> to vector<32x256xf32>
    %255 = arith.mulf %251, %254 : vector<32x256xf32>
    %256 = vector.broadcast %250 : vector<32x1xf32> to vector<32x256xf32>
    %257 = arith.mulf %256, %255 : vector<32x256xf32>
    %258 = arith.addf %248, %257 : vector<32x256xf32>
    %cst_213 = arith.constant dense<0.000000e+00> : vector<256xf32>
    %259 = vector.multi_reduction <add>, %258, %cst_213 [0] : vector<32x256xf32> to vector<256xf32>
    %260 = vector.shape_cast %259 : vector<256xf32> to vector<1x256xf32>
    %c0_214 = arith.constant 0 : index
    %c0_215 = arith.constant 0 : index
    %261 = vector.load %arg11[%c0_214, %c0_215] : memref<1x1xf32, #tpu.memory_space<vmem>>, vector<1x1xf32>
    %262 = vector.broadcast %261 : vector<1x1xf32> to vector<1x256xf32>
    %263 = arith.addf %260, %262 : vector<1x256xf32>
    %264 = arith.addf %1, %263 : vector<1x256xf32>
    %c0_216 = arith.constant 0 : index
    %c0_217 = arith.constant 0 : index
    %c0_218 = arith.constant 0 : index
    %265 = vector.load %arg12[%c0_216, %c0_217, %c0_218] : memref<1x1x256xf32, #tpu.memory_space<vmem>>, vector<1x1x256xf32>
    %266 = vector.shape_cast %265 : vector<1x1x256xf32> to vector<1x256xf32>
    %267 = vector.shape_cast %264 : vector<1x256xf32> to vector<1x1x256xf32>
    tpu.vector_store %arg12[%c0_216, %c0_217, %c0_218], %267 {strides = array<i32>} : memref<1x1x256xf32, #tpu.memory_space<vmem>>, vector<1x1x256xf32>,
    return
  }
  func.func @transform_0(%arg0: i32) -> (i32, i32, i32) {
    %c0_i32 = arith.constant 0 : i32
    %c0_i32_0 = arith.constant 0 : i32
    %c0_i32_1 = arith.constant 0 : i32
    return %arg0, %c0_i32, %c0_i32_0 : i32, i32, i32
  }
  func.func @transform_1(%arg0: i32) -> (i32, i32, i32) {
    %c0_i32 = arith.constant 0 : i32
    %c0_i32_0 = arith.constant 0 : i32
    %c0_i32_1 = arith.constant 0 : i32
    return %arg0, %c0_i32, %c0_i32_0 : i32, i32, i32
  }
  func.func @transform_2(%arg0: i32) -> (i32, i32, i32) {
    %c0_i32 = arith.constant 0 : i32
    %c0_i32_0 = arith.constant 0 : i32
    %c0_i32_1 = arith.constant 0 : i32
    %c0_i32_2 = arith.constant 0 : i32
    return %c0_i32, %c0_i32_0, %c0_i32_1 : i32, i32, i32
  }
  func.func @transform_3(%arg0: i32) -> (i32, i32) {
    %c0_i32 = arith.constant 0 : i32
    %c0_i32_0 = arith.constant 0 : i32
    %c0_i32_1 = arith.constant 0 : i32
    return %c0_i32, %c0_i32_0 : i32, i32
  }
  func.func @transform_4(%arg0: i32) -> (i32, i32) {
    %c0_i32 = arith.constant 0 : i32
    %c0_i32_0 = arith.constant 0 : i32
    %c0_i32_1 = arith.constant 0 : i32
    return %c0_i32, %c0_i32_0 : i32, i32
  }
  func.func @transform_5(%arg0: i32) -> (i32, i32) {
    %c0_i32 = arith.constant 0 : i32
    %c0_i32_0 = arith.constant 0 : i32
    %c0_i32_1 = arith.constant 0 : i32
    return %c0_i32, %c0_i32_0 : i32, i32
  }
  func.func @transform_6(%arg0: i32) -> (i32, i32) {
    %c0_i32 = arith.constant 0 : i32
    %c0_i32_0 = arith.constant 0 : i32
    %c0_i32_1 = arith.constant 0 : i32
    return %c0_i32, %c0_i32_0 : i32, i32
  }
  func.func @transform_7(%arg0: i32) -> (i32, i32) {
    %c0_i32 = arith.constant 0 : i32
    %c0_i32_0 = arith.constant 0 : i32
    %c0_i32_1 = arith.constant 0 : i32
    return %c0_i32, %c0_i32_0 : i32, i32
  }
  func.func @transform_8(%arg0: i32) -> (i32, i32) {
    %c0_i32 = arith.constant 0 : i32
    %c0_i32_0 = arith.constant 0 : i32
    %c0_i32_1 = arith.constant 0 : i32
    return %c0_i32, %c0_i32_0 : i32, i32
  }
  func.func @transform_9(%arg0: i32) -> (i32, i32, i32) {
    %c0_i32 = arith.constant 0 : i32
    %c0_i32_0 = arith.constant 0 : i32
    %c0_i32_1 = arith.constant 0 : i32
    %c0_i32_2 = arith.constant 0 : i32
    return %c0_i32, %c0_i32_0, %c0_i32_1 : i32, i32, i32
  }
  func.func @transform_10(%arg0: i32) -> (i32, i32) {
    %c0_i32 = arith.constant 0 : i32
    %c0_i32_0 = arith.constant 0 : i32
    %c0_i32_1 = arith.constant 0 : i32
    return %c0_i32, %c0_i32_0 : i32, i32
  }
  func.func @transform_11(%arg0: i32) -> (i32, i32, i32) {
    %c0_i32 = arith.constant 0 : i32
    %c0_i32_0 = arith.constant 0 : i32
    %c0_i32_1 = arith.constant 0 : i32
    return %arg0, %c0_i32, %c0_i32_0 : i32, i32, i32
  }
}

</mosaic_0001>

<llo_original>
// kernel: dualnet_forward.1
$region0: #{dualnet_forward.1}
  #allocation0 [shape = 'u32[]', space=smem, size = 0x4, offset = 0x4, fixed_abs, tag = 'smem constant byte address 0x4 - core index']
  #allocation1 [shape = 'u32[72,128]{1,0:T(1,128)}', space=vmem, size = 0x9000, scoped, tag = 'internal scratch']
  #allocation2 [shape = 'f32[18,256]{1,0:T(8,128)}', space=vmem, size = 0x6000, scoped, tag = 'scratch operand']
  #allocation3 [shape = 'f32[288,256]{1,0:T(8,128)}', space=vmem, size = 0x48000, scoped, tag = 'scratch operand']
  #allocation4 [shape = 'f32[1,1]{1,0:T(1,128)S(1)}', space=vmem, size = 0x200, scoped, tag = 'scoped memory for dualnet_forward.1']
  %s0 = inlined_call_operand.vmem [shape: f32[2,1,256], index: 0, kind: input, shape index: {}]
  %s1 = inlined_call_operand.vmem [shape: f32[2,1,256], index: 1, kind: input, shape index: {}]
  %s2 = inlined_call_operand.vmem [shape: f32[9,1,256], index: 2, kind: input, shape index: {}]
  %s3 = inlined_call_operand.vmem [shape: f32[32,18], index: 3, kind: input, shape index: {}]
  %s4 = inlined_call_operand.vmem [shape: f32[32,1], index: 4, kind: input, shape index: {}]
  %s5 = inlined_call_operand.vmem [shape: f32[32,1], index: 5, kind: input, shape index: {}]
  %s6 = inlined_call_operand.vmem [shape: f32[32,288], index: 6, kind: input, shape index: {}]
  %s7 = inlined_call_operand.vmem [shape: f32[32,1], index: 7, kind: input, shape index: {}]
  %s8 = inlined_call_operand.vmem [shape: f32[32,1], index: 8, kind: input, shape index: {}]
  %s9 = inlined_call_operand.vmem [shape: f32[9,32,1], index: 9, kind: input, shape index: {}]
  %s10 = inlined_call_operand.<no memory space> [shape: f32[1,1], index: 10, kind: input, shape index: {}]
  %s11 = inlined_call_operand.vmem [shape: f32[2,1,256], index: 11, kind: output, shape index: {}]
  %s12 = sld [smem:[#allocation0]]
  $region77: #{dualnet_forward.1} parent=0
    _
  %s14 = ssub.s32 1, %s12
  %s15 = scalar_select 0, %s14, %s12
  %v16 = vstv %s10
  %17 = vst [vmem:[#allocation4] sm:$0x1] %v16
  loop: start=0, step=1, limit=4
  $region2: #{dualnet_forward.1} parent=0 // loop_pre_header
    _
  $region3: #{dualnet_forward.1} parent=0 // loop_header
    %s19 = sphi 0, %s23
    %p20 = scmp.ge.s32.totalorder %s19, 4
    %s29 = sphi 0, %s31
    %s32 = sphi 0, %s29
    %s33 = sphi 0, %s32
    %s49 = sphi 0, %s33
    %s55 = sphi 0, %s57
    %s58 = sphi 0, %s55
    %s59 = sphi 0, %s58
    %s75 = sphi 0, %s59
    %s79 = sphi 0, %s79
    %s81 = sphi 0, %s79
    %s82 = sphi 0, %s81
    %s96 = sphi 0, %s82
    %s100 = sphi 0, %s100
    %s102 = sphi 0, %s100
    %s103 = sphi 0, %s102
    %s117 = sphi 0, %s103
    %s121 = sphi 0, %s121
    %s123 = sphi 0, %s121
    %s124 = sphi 0, %s123
    %s138 = sphi 0, %s124
    %s142 = sphi 0, %s142
    %s144 = sphi 0, %s142
    %s145 = sphi 0, %s144
    %s159 = sphi 0, %s145
    %s163 = sphi 0, %s163
    %s165 = sphi 0, %s163
    %s166 = sphi 0, %s165
    %s180 = sphi 0, %s166
    %s184 = sphi 0, %s184
    %s186 = sphi 0, %s184
    %s187 = sphi 0, %s186
    %s201 = sphi 0, %s187
    %s205 = sphi 0, %s205
    %s207 = sphi 0, %s205
    %s208 = sphi 0, %s207
    %s222 = sphi 0, %s208
    %s226 = sphi 0, %s226
    %s228 = sphi 0, %s226
    %s229 = sphi 0, %s228
    %s243 = sphi 0, %s229
    %s247 = sphi 0, %s247
    %s249 = sphi 0, %s247
    %s250 = sphi 0, %s249
    %s264 = sphi 0, %s250
    %s270 = sphi 0, %s272
    %s273 = sphi 0, %s270
    %s274 = sphi 0, %s273
    %s290 = sphi 0, %s274
  $region4: #{dualnet_forward.1} parent=0 // loop_header_branch
    %22 = sbr.rel (%p20) target = $region8
  $region5: #{dualnet_forward.1} parent=0 // loop_body
    %s24 = ssub.s32 %s19, 1
    %s25 = ssub.s32 %s19, 2
    %s26 = sadd.s32 %s19, 1
    %s27 = ssub.s32 %s19, %s26
    %p28 = scmp.eq.s32.totalorder %s27, 0
    %s30 = sadd.s32 %s29, 1
    %s31 = scalar_select %p28, %s29, %s30
    %p34 = pneg %p28
    %p35 = scmp.eq.s32.totalorder %s19, 1
    %p36 = por %p34, %p35
    %p37 = scmp.ne.s32.totalorder %s29, %s32
    %p38 = scmp.eq.s32.totalorder %s19, 0
    %p39 = por %p37, %p38
    %p40 = scmp.ne.s32.totalorder %s29, %s32
    %p41 = scmp.eq.s32.totalorder %s24, 1
    %p42 = por %p40, %p41
    %p43 = scmp.ne.s32.totalorder %s32, %s33
    %p44 = scmp.eq.s32.totalorder %s24, 0
    %p45 = por %p43, %p44
    %p46 = scmp.ne.s32.totalorder %s32, %s33
    %p47 = scmp.eq.s32.totalorder %s25, 1
    %p48 = por %p46, %p47
    %p50 = scmp.ne.s32.totalorder %s33, %s49
    %p51 = scmp.eq.s32.totalorder %s25, 0
    %p52 = por %p50, %p51
    %s53 = ssub.s32 %s19, %s26
    %p54 = scmp.eq.s32.totalorder %s53, 0
    %s56 = sadd.s32 %s55, 1
    %s57 = scalar_select %p54, %s55, %s56
    %p60 = pneg %p54
    %p61 = scmp.eq.s32.totalorder %s19, 1
    %p62 = por %p60, %p61
    %p63 = scmp.ne.s32.totalorder %s55, %s58
    %p64 = scmp.eq.s32.totalorder %s19, 0
    %p65 = por %p63, %p64
    %p66 = scmp.ne.s32.totalorder %s55, %s58
    %p67 = scmp.eq.s32.totalorder %s24, 1
    %p68 = por %p66, %p67
    %p69 = scmp.ne.s32.totalorder %s58, %s59
    %p70 = scmp.eq.s32.totalorder %s24, 0
    %p71 = por %p69, %p70
    %p72 = scmp.ne.s32.totalorder %s58, %s59
    %p73 = scmp.eq.s32.totalorder %s25, 1
    %p74 = por %p72, %p73
    %p76 = scmp.ne.s32.totalorder %s59, %s75
    %p77 = scmp.eq.s32.totalorder %s25, 0
    %p78 = por %p76, %p77
    %s80 = sadd.s32 %s79, 1
    %p83 = scmp.eq.s32.totalorder %s19, 1
    %p84 = scmp.ne.s32.totalorder %s79, %s81
    %p85 = scmp.eq.s32.totalorder %s19, 0
    %p86 = por %p84, %p85
    %p87 = scmp.ne.s32.totalorder %s79, %s81
    %p88 = scmp.eq.s32.totalorder %s24, 1
    %p89 = por %p87, %p88
    %p90 = scmp.ne.s32.totalorder %s81, %s82
    %p91 = scmp.eq.s32.totalorder %s24, 0
    %p92 = por %p90, %p91
    %p93 = scmp.ne.s32.totalorder %s81, %s82
    %p94 = scmp.eq.s32.totalorder %s25, 1
    %p95 = por %p93, %p94
    %p97 = scmp.ne.s32.totalorder %s82, %s96
    %p98 = scmp.eq.s32.totalorder %s25, 0
    %p99 = por %p97, %p98
    %s101 = sadd.s32 %s100, 1
    %p104 = scmp.eq.s32.totalorder %s19, 1
    %p105 = scmp.ne.s32.totalorder %s100, %s102
    %p106 = scmp.eq.s32.totalorder %s19, 0
    %p107 = por %p105, %p106
    %p108 = scmp.ne.s32.totalorder %s100, %s102
    %p109 = scmp.eq.s32.totalorder %s24, 1
    %p110 = por %p108, %p109
    %p111 = scmp.ne.s32.totalorder %s102, %s103
    %p112 = scmp.eq.s32.totalorder %s24, 0
    %p113 = por %p111, %p112
    %p114 = scmp.ne.s32.totalorder %s102, %s103
    %p115 = scmp.eq.s32.totalorder %s25, 1
    %p116 = por %p114, %p115
    %p118 = scmp.ne.s32.totalorder %s103, %s117
    %p119 = scmp.eq.s32.totalorder %s25, 0
    %p120 = por %p118, %p119
    %s122 = sadd.s32 %s121, 1
    %p125 = scmp.eq.s32.totalorder %s19, 1
    %p126 = scmp.ne.s32.totalorder %s121, %s123
    %p127 = scmp.eq.s32.totalorder %s19, 0
    %p128 = por %p126, %p127
    %p129 = scmp.ne.s32.totalorder %s121, %s123
    %p130 = scmp.eq.s32.totalorder %s24, 1
    %p131 = por %p129, %p130
    %p132 = scmp.ne.s32.totalorder %s123, %s124
    %p133 = scmp.eq.s32.totalorder %s24, 0
    %p134 = por %p132, %p133
    %p135 = scmp.ne.s32.totalorder %s123, %s124
    %p136 = scmp.eq.s32.totalorder %s25, 1
    %p137 = por %p135, %p136
    %p139 = scmp.ne.s32.totalorder %s124, %s138
    %p140 = scmp.eq.s32.totalorder %s25, 0
    %p141 = por %p139, %p140
    %s143 = sadd.s32 %s142, 1
    %p146 = scmp.eq.s32.totalorder %s19, 1
    %p147 = scmp.ne.s32.totalorder %s142, %s144
    %p148 = scmp.eq.s32.totalorder %s19, 0
    %p149 = por %p147, %p148
    %p150 = scmp.ne.s32.totalorder %s142, %s144
    %p151 = scmp.eq.s32.totalorder %s24, 1
    %p152 = por %p150, %p151
    %p153 = scmp.ne.s32.totalorder %s144, %s145
    %p154 = scmp.eq.s32.totalorder %s24, 0
    %p155 = por %p153, %p154
    %p156 = scmp.ne.s32.totalorder %s144, %s145
    %p157 = scmp.eq.s32.totalorder %s25, 1
    %p158 = por %p156, %p157
    %p160 = scmp.ne.s32.totalorder %s145, %s159
    %p161 = scmp.eq.s32.totalorder %s25, 0
    %p162 = por %p160, %p161
    %s164 = sadd.s32 %s163, 1
    %p167 = scmp.eq.s32.totalorder %s19, 1
    %p168 = scmp.ne.s32.totalorder %s163, %s165
    %p169 = scmp.eq.s32.totalorder %s19, 0
    %p170 = por %p168, %p169
    %p171 = scmp.ne.s32.totalorder %s163, %s165
    %p172 = scmp.eq.s32.totalorder %s24, 1
    %p173 = por %p171, %p172
    %p174 = scmp.ne.s32.totalorder %s165, %s166
    %p175 = scmp.eq.s32.totalorder %s24, 0
    %p176 = por %p174, %p175
    %p177 = scmp.ne.s32.totalorder %s165, %s166
    %p178 = scmp.eq.s32.totalorder %s25, 1
    %p179 = por %p177, %p178
    %p181 = scmp.ne.s32.totalorder %s166, %s180
    %p182 = scmp.eq.s32.totalorder %s25, 0
    %p183 = por %p181, %p182
    %s185 = sadd.s32 %s184, 1
    %p188 = scmp.eq.s32.totalorder %s19, 1
    %p189 = scmp.ne.s32.totalorder %s184, %s186
    %p190 = scmp.eq.s32.totalorder %s19, 0
    %p191 = por %p189, %p190
    %p192 = scmp.ne.s32.totalorder %s184, %s186
    %p193 = scmp.eq.s32.totalorder %s24, 1
    %p194 = por %p192, %p193
    %p195 = scmp.ne.s32.totalorder %s186, %s187
    %p196 = scmp.eq.s32.totalorder %s24, 0
    %p197 = por %p195, %p196
    %p198 = scmp.ne.s32.totalorder %s186, %s187
    %p199 = scmp.eq.s32.totalorder %s25, 1
    %p200 = por %p198, %p199
    %p202 = scmp.ne.s32.totalorder %s187, %s201
    %p203 = scmp.eq.s32.totalorder %s25, 0
    %p204 = por %p202, %p203
    %s206 = sadd.s32 %s205, 1
    %p209 = scmp.eq.s32.totalorder %s19, 1
    %p210 = scmp.ne.s32.totalorder %s205, %s207
    %p211 = scmp.eq.s32.totalorder %s19, 0
    %p212 = por %p210, %p211
    %p213 = scmp.ne.s32.totalorder %s205, %s207
    %p214 = scmp.eq.s32.totalorder %s24, 1
    %p215 = por %p213, %p214
    %p216 = scmp.ne.s32.totalorder %s207, %s208
    %p217 = scmp.eq.s32.totalorder %s24, 0
    %p218 = por %p216, %p217
    %p219 = scmp.ne.s32.totalorder %s207, %s208
    %p220 = scmp.eq.s32.totalorder %s25, 1
    %p221 = por %p219, %p220
    %p223 = scmp.ne.s32.totalorder %s208, %s222
    %p224 = scmp.eq.s32.totalorder %s25, 0
    %p225 = por %p223, %p224
    %s227 = sadd.s32 %s226, 1
    %p230 = scmp.eq.s32.totalorder %s19, 1
    %p231 = scmp.ne.s32.totalorder %s226, %s228
    %p232 = scmp.eq.s32.totalorder %s19, 0
    %p233 = por %p231, %p232
    %p234 = scmp.ne.s32.totalorder %s226, %s228
    %p235 = scmp.eq.s32.totalorder %s24, 1
    %p236 = por %p234, %p235
    %p237 = scmp.ne.s32.totalorder %s228, %s229
    %p238 = scmp.eq.s32.totalorder %s24, 0
    %p239 = por %p237, %p238
    %p240 = scmp.ne.s32.totalorder %s228, %s229
    %p241 = scmp.eq.s32.totalorder %s25, 1
    %p242 = por %p240, %p241
    %p244 = scmp.ne.s32.totalorder %s229, %s243
    %p245 = scmp.eq.s32.totalorder %s25, 0
    %p246 = por %p244, %p245
    %s248 = sadd.s32 %s247, 1
    %p251 = scmp.eq.s32.totalorder %s19, 1
    %p252 = scmp.ne.s32.totalorder %s247, %s249
    %p253 = scmp.eq.s32.totalorder %s19, 0
    %p254 = por %p252, %p253
    %p255 = scmp.ne.s32.totalorder %s247, %s249
    %p256 = scmp.eq.s32.totalorder %s24, 1
    %p257 = por %p255, %p256
    %p258 = scmp.ne.s32.totalorder %s249, %s250
    %p259 = scmp.eq.s32.totalorder %s24, 0
    %p260 = por %p258, %p259
    %p261 = scmp.ne.s32.totalorder %s249, %s250
    %p262 = scmp.eq.s32.totalorder %s25, 1
    %p263 = por %p261, %p262
    %p265 = scmp.ne.s32.totalorder %s250, %s264
    %p266 = scmp.eq.s32.totalorder %s25, 0
    %p267 = por %p265, %p266
    %s268 = ssub.s32 %s19, %s26
    %p269 = scmp.eq.s32.totalorder %s268, 0
    %s271 = sadd.s32 %s270, 1
    %s272 = scalar_select %p269, %s270, %s271
    %p275 = pneg %p269
    %p276 = scmp.eq.s32.totalorder %s19, 1
    %p277 = por %p275, %p276
    %p278 = scmp.ne.s32.totalorder %s270, %s273
    %p279 = scmp.eq.s32.totalorder %s19, 0
    %p280 = por %p278, %p279
    %p281 = scmp.ne.s32.totalorder %s270, %s273
    %p282 = scmp.eq.s32.totalorder %s24, 1
    %p283 = por %p281, %p282
    %p284 = scmp.ne.s32.totalorder %s273, %s274
    %p285 = scmp.eq.s32.totalorder %s24, 0
    %p286 = por %p284, %p285
    %p287 = scmp.ne.s32.totalorder %s273, %s274
    %p288 = scmp.eq.s32.totalorder %s25, 1
    %p289 = por %p287, %p288
    %p291 = scmp.ne.s32.totalorder %s274, %s290
    %p292 = scmp.eq.s32.totalorder %s25, 0
    %p293 = por %p291, %p292
    %p294 = scmp.le.s32.totalorder 1, %s19
    %p295 = scmp.lt.s32.totalorder %s19, 3
    %p296 = pnand %p294, %p295
    %p297 = pneg %p296
    // Predicated region
    $region9: #{dualnet_forward.1} parent=5 // pred_check
      _
    $region10: #{dualnet_forward.1} parent=5 // pred_check_branch
      %299 = sbr.rel (%p296) target = $region12
    $region11: #{dualnet_forward.1} parent=5 // pred_region
      %s300 = ssub.s32 %s19, 1
      // Predicated region
      $region13: #{dualnet_forward.1} parent=11 // pred_check
        %p301 = pneg %p92
      $region14: #{dualnet_forward.1} parent=11 // pred_check_branch
        %303 = sbr.rel (%p301) target = $region16
      $region15: #{dualnet_forward.1} parent=11 // pred_region
        _
      $region16: #{dualnet_forward.1} parent=11 // pred_fallthru
        _
      // Predicated region
      $region17: #{dualnet_forward.1} parent=11 // pred_check
        %p304 = pneg %p113
      $region18: #{dualnet_forward.1} parent=11 // pred_check_branch
        %306 = sbr.rel (%p304) target = $region20
      $region19: #{dualnet_forward.1} parent=11 // pred_region
        _
      $region20: #{dualnet_forward.1} parent=11 // pred_fallthru
        _
      // Predicated region
      $region21: #{dualnet_forward.1} parent=11 // pred_check
        %p307 = pneg %p134
      $region22: #{dualnet_forward.1} parent=11 // pred_check_branch
        %309 = sbr.rel (%p307) target = $region24
      $region23: #{dualnet_forward.1} parent=11 // pred_region
        _
      $region24: #{dualnet_forward.1} parent=11 // pred_fallthru
        _
      // Predicated region
      $region25: #{dualnet_forward.1} parent=11 // pred_check
        %p310 = pneg %p155
      $region26: #{dualnet_forward.1} parent=11 // pred_check_branch
        %312 = sbr.rel (%p310) target = $region28
      $region27: #{dualnet_forward.1} parent=11 // pred_region
        _
      $region28: #{dualnet_forward.1} parent=11 // pred_fallthru
        _
      // Predicated region
      $region29: #{dualnet_forward.1} parent=11 // pred_check
        %p313 = pneg %p176
      $region30: #{dualnet_forward.1} parent=11 // pred_check_branch
        %315 = sbr.rel (%p313) target = $region32
      $region31: #{dualnet_forward.1} parent=11 // pred_region
        _
      $region32: #{dualnet_forward.1} parent=11 // pred_fallthru
        _
      // Predicated region
      $region33: #{dualnet_forward.1} parent=11 // pred_check
        %p316 = pneg %p197
      $region34: #{dualnet_forward.1} parent=11 // pred_check_branch
        %318 = sbr.rel (%p316) target = $region36
      $region35: #{dualnet_forward.1} parent=11 // pred_region
        _
      $region36: #{dualnet_forward.1} parent=11 // pred_fallthru
        _
      // Predicated region
      $region37: #{dualnet_forward.1} parent=11 // pred_check
        %p319 = pneg %p218
      $region38: #{dualnet_forward.1} parent=11 // pred_check_branch
        %321 = sbr.rel (%p319) target = $region40
      $region39: #{dualnet_forward.1} parent=11 // pred_region
        _
      $region40: #{dualnet_forward.1} parent=11 // pred_fallthru
        _
      // Predicated region
      $region41: #{dualnet_forward.1} parent=11 // pred_check
        %p322 = pneg %p239
      $region42: #{dualnet_forward.1} parent=11 // pred_check_branch
        %324 = sbr.rel (%p322) target = $region44
      $region43: #{dualnet_forward.1} parent=11 // pred_region
        _
      $region44: #{dualnet_forward.1} parent=11 // pred_fallthru
        _
      // Predicated region
      $region45: #{dualnet_forward.1} parent=11 // pred_check
        %p325 = pneg %p260
      $region46: #{dualnet_forward.1} parent=11 // pred_check_branch
        %327 = sbr.rel (%p325) target = $region48
      $region47: #{dualnet_forward.1} parent=11 // pred_region
        _
      $region48: #{dualnet_forward.1} parent=11 // pred_fallthru
        _
    $region12: #{dualnet_forward.1} parent=5 // pred_fallthru
      _
    %p328 = scmp.lt.s32.totalorder %s19, 2
    // Predicated region
    $region49: #{dualnet_forward.1} parent=5 // pred_check
      %p329 = pneg %p328
    $region50: #{dualnet_forward.1} parent=5 // pred_check_branch
      %331 = sbr.rel (%p329) target = $region52
    $region51: #{dualnet_forward.1} parent=5 // pred_region
      // Predicated region
      $region53: #{dualnet_forward.1} parent=51 // pred_check
        %p332 = pneg %p39
      $region54: #{dualnet_forward.1} parent=51 // pred_check_branch
        %334 = sbr.rel (%p332) target = $region56
      $region55: #{dualnet_forward.1} parent=51 // pred_region
        %p335 = scmp.lt.s32.totalorder %s19, 1
        %s336 = scalar_select %p335, %s19, 1
        %s337 = smul.addr %s336, 2
        %s338 = scalar_lea.vmem %s0, %s337
      $region56: #{dualnet_forward.1} parent=51 // pred_fallthru
        _
      // Predicated region
      $region57: #{dualnet_forward.1} parent=51 // pred_check
        %p339 = pneg %p65
      $region58: #{dualnet_forward.1} parent=51 // pred_check_branch
        %341 = sbr.rel (%p339) target = $region60
      $region59: #{dualnet_forward.1} parent=51 // pred_region
        %p342 = scmp.lt.s32.totalorder %s19, 1
        %s343 = scalar_select %p342, %s19, 1
        %s344 = smul.addr %s343, 2
        %s345 = scalar_lea.vmem %s1, %s344
      $region60: #{dualnet_forward.1} parent=51 // pred_fallthru
        _
    $region52: #{dualnet_forward.1} parent=5 // pred_fallthru
      _
    %p346 = scmp.le.s32.totalorder 1, %s19
    %p347 = scmp.lt.s32.totalorder %s19, 3
    %p348 = pnand %p346, %p347
    %p349 = pneg %p348
    // Predicated region
    $region61: #{dualnet_forward.1} parent=5 // pred_check
      _
    $region62: #{dualnet_forward.1} parent=5 // pred_check_branch
      %351 = sbr.rel (%p348) target = $region64
    $region63: #{dualnet_forward.1} parent=5 // pred_region
      %s352 = ssub.s32 %s19, 1
      %p353 = scmp.lt.s32.totalorder %s24, 1
      %s354 = scalar_select %p353, %s24, 1
      %s355 = smul.addr %s354, 2
      %s356 = scalar_lea.vmem %s0, %s355
      %p357 = pneg %p45
      %p358 = pneg %p42
      %p359 = scmp.lt.s32.totalorder %s24, 1
      %s360 = scalar_select %p359, %s24, 1
      %s361 = smul.addr %s360, 2
      %s362 = scalar_lea.vmem %s1, %s361
      %p363 = pneg %p71
      %p364 = pneg %p68
      %p365 = pneg %p92
      %p366 = pneg %p89
      %p367 = pneg %p113
      %p368 = pneg %p110
      %p369 = pneg %p134
      %p370 = pneg %p131
      %p371 = pneg %p155
      %p372 = pneg %p152
      %p373 = pneg %p176
      %p374 = pneg %p173
      %p375 = pneg %p197
      %p376 = pneg %p194
      %p377 = pneg %p218
      %p378 = pneg %p215
      %p379 = pneg %p239
      %p380 = pneg %p236
      %p381 = pneg %p260
      %p382 = pneg %p257
      %p383 = pneg %p286
      %p384 = pneg %p283
      %p385 = scmp.lt.s32.totalorder %s24, 1
      %s386 = scalar_select %p385, %s24, 1
      %s387 = smul.addr %s386, 2
      %s388 = scalar_lea.vmem %s11, %s387
      %p389 = scmp.lt.s32.totalorder %s24, 1
      %s390 = scalar_select %p389, %s24, 1
      %s391 = smul.addr %s390, 2
      %s392 = scalar_lea.vmem %s0, %s391
      %p393 = scmp.lt.s32.totalorder %s24, 1
      %s394 = scalar_select %p393, %s24, 1
      %s395 = smul.addr %s394, 2
      %s396 = scalar_lea.vmem %s1, %s395
      %p397 = scmp.lt.s32.totalorder %s24, 1
      %s398 = scalar_select %p397, %s24, 1
      %s399 = smul.addr %s398, 2
      %s400 = scalar_lea.vmem %s11, %s399
      %v401 = vld [vmem:[%s392] sm:$0x3]
      %v402 = vld [vmem:[%s396] sm:$0x3]
      %v404 = vperm.slane %v401, 0
      %v405 = vperm.slane %v401, 1
      %408 = vrot.lane.b32.xlu0 %v404, 17
      %v409 = vpop.permute.xlu0 %408
      %410 = vrot.lane.b32.xlu0 %v405, 17
      %v411 = vpop.permute.xlu0 %410
      %v412 = vlaneseq
      %v413 = vand.u32 %v412, 127
      %vm414 = vcmp.lt.s32.totalorder %v413, 17
      %v415 = vsel %vm414, %v409, %v411
      %v416 = vsel %vm414, %v411, %v409
      %v417 = vld [vmem:[%s2] sm:$0x3]
      %v419 = vperm.slane %v417, 0
      %v420 = vperm.slane %v417, 1
      %v423 = vmul.f32 %v416, %v419
      %v424 = vmul.f32 %v415, %v420
      %v427 = vrot.slane %v424, 7
      %vm428 = vcmask 1040384
      %v429 = vsel %vm428, %v423, %v427
      %v431 = vlaneseq
      %vm432 = vcmp.ge.s32.totalorder %v431, 0
      %vm433 = vcmp.lt.s32.totalorder %v431, 256
      %vm434 = vmand %vm432, %vm433
      %435 = vst.msk [vmem:[#allocation2] ss:$8 sm:$0x3] %vm434, %v429
      %436 = vst.msk [vmem:[#allocation2] ss:$8 sm:$0x0] %vm434, %v429
      %v438 = vperm.slane %v402, 0
      %v439 = vperm.slane %v402, 1
      %442 = vrot.lane.b32.xlu0 %v438, 17
      %v443 = vpop.permute.xlu0 %442
      %444 = vrot.lane.b32.xlu0 %v439, 17
      %v445 = vpop.permute.xlu0 %444
      %v446 = vsel %vm414, %v443, %v445
      %v447 = vsel %vm414, %v445, %v443
      %v448 = vld [vmem:[%s2] sm:$0x3]
      %v450 = vperm.slane %v448, 0
      %v451 = vperm.slane %v448, 1
      %v454 = vmul.f32 %v447, %v450
      %v455 = vmul.f32 %v446, %v451
      %v458 = vrot.slane %v455, 7
      %v459 = vsel %vm428, %v454, %v458
      %s461 = scalar_lea.vmem [#allocation2], 1
      %462 = vst.msk [vmem:[%s461] ss:$8 sm:$0x3] %vm434, %v459
      %463 = vst.msk [vmem:[%s461] ss:$8 sm:$0x0] %vm434, %v459
      %464 = vrot.lane.b32.xlu0 %v404, 16
      %v465 = vpop.permute.xlu0 %464
      %466 = vrot.lane.b32.xlu0 %v405, 16
      %v467 = vpop.permute.xlu0 %466
      %vm468 = vcmp.lt.s32.totalorder %v413, 16
      %v469 = vsel %vm468, %v465, %v467
      %v470 = vsel %vm468, %v467, %v465
      %s471 = scalar_lea.vmem %s2, 2
      %v472 = vld [vmem:[%s471] sm:$0x3]
      %v474 = vperm.slane %v472, 0
      %v475 = vperm.slane %v472, 1
      %v478 = vmul.f32 %v470, %v474
      %v479 = vmul.f32 %v469, %v475
      %v482 = vrot.slane %v479, 7
      %v483 = vsel %vm428, %v478, %v482
      %s485 = scalar_lea.vmem [#allocation2], 2
      %486 = vst.msk [vmem:[%s485] ss:$8 sm:$0x3] %vm434, %v483
      %487 = vst.msk [vmem:[%s485] ss:$8 sm:$0x0] %vm434, %v483
      %488 = vrot.lane.b32.xlu0 %v438, 16
      %v489 = vpop.permute.xlu0 %488
      %490 = vrot.lane.b32.xlu0 %v439, 16
      %v491 = vpop.permute.xlu0 %490
      %v492 = vsel %vm468, %v489, %v491
      %v493 = vsel %vm468, %v491, %v489
      %v494 = vld [vmem:[%s471] sm:$0x3]
      %v496 = vperm.slane %v494, 0
      %v497 = vperm.slane %v494, 1
      %v500 = vmul.f32 %v493, %v496
      %v501 = vmul.f32 %v492, %v497
      %v504 = vrot.slane %v501, 7
      %v505 = vsel %vm428, %v500, %v504
      %s507 = scalar_lea.vmem [#allocation2], 3
      %508 = vst.msk [vmem:[%s507] ss:$8 sm:$0x3] %vm434, %v505
      %509 = vst.msk [vmem:[%s507] ss:$8 sm:$0x0] %vm434, %v505
      %510 = vrot.lane.b32.xlu0 %v404, 15
      %v511 = vpop.permute.xlu0 %510
      %512 = vrot.lane.b32.xlu0 %v405, 15
      %v513 = vpop.permute.xlu0 %512
      %vm514 = vcmp.lt.s32.totalorder %v413, 15
      %v515 = vsel %vm514, %v511, %v513
      %v516 = vsel %vm514, %v513, %v511
      %s517 = scalar_lea.vmem %s2, 4
      %v518 = vld [vmem:[%s517] sm:$0x3]
      %v520 = vperm.slane %v518, 0
      %v521 = vperm.slane %v518, 1
      %v524 = vmul.f32 %v516, %v520
      %v525 = vmul.f32 %v515, %v521
      %v528 = vrot.slane %v525, 7
      %v529 = vsel %vm428, %v524, %v528
      %s531 = scalar_lea.vmem [#allocation2], 4
      %532 = vst.msk [vmem:[%s531] ss:$8 sm:$0x3] %vm434, %v529
      %533 = vst.msk [vmem:[%s531] ss:$8 sm:$0x0] %vm434, %v529
      %534 = vrot.lane.b32.xlu0 %v438, 15
      %v535 = vpop.permute.xlu0 %534
      %536 = vrot.lane.b32.xlu0 %v439, 15
      %v537 = vpop.permute.xlu0 %536
      %v538 = vsel %vm514, %v535, %v537
      %v539 = vsel %vm514, %v537, %v535
      %v540 = vld [vmem:[%s517] sm:$0x3]
      %v542 = vperm.slane %v540, 0
      %v543 = vperm.slane %v540, 1
      %v546 = vmul.f32 %v539, %v542
      %v547 = vmul.f32 %v538, %v543
      %v550 = vrot.slane %v547, 7
      %v551 = vsel %vm428, %v546, %v550
      %s553 = scalar_lea.vmem [#allocation2], 5
      %554 = vst.msk [vmem:[%s553] ss:$8 sm:$0x3] %vm434, %v551
      %555 = vst.msk [vmem:[%s553] ss:$8 sm:$0x0] %vm434, %v551
      %556 = vrot.lane.b32.xlu0 %v404, 1
      %v557 = vpop.permute.xlu0 %556
      %558 = vrot.lane.b32.xlu0 %v405, 1
      %v559 = vpop.permute.xlu0 %558
      %vm560 = vcmp.lt.s32.totalorder %v413, 1
      %v561 = vsel %vm560, %v557, %v559
      %v562 = vsel %vm560, %v559, %v557
      %s563 = scalar_lea.vmem %s2, 6
      %v564 = vld [vmem:[%s563] sm:$0x3]
      %v566 = vperm.slane %v564, 0
      %v567 = vperm.slane %v564, 1
      %v570 = vmul.f32 %v562, %v566
      %v571 = vmul.f32 %v561, %v567
      %v574 = vrot.slane %v571, 7
      %v575 = vsel %vm428, %v570, %v574
      %s577 = scalar_lea.vmem [#allocation2], 6
      %578 = vst.msk [vmem:[%s577] ss:$8 sm:$0x3] %vm434, %v575
      %579 = vst.msk [vmem:[%s577] ss:$8 sm:$0x0] %vm434, %v575
      %580 = vrot.lane.b32.xlu0 %v438, 1
      %v581 = vpop.permute.xlu0 %580
      %582 = vrot.lane.b32.xlu0 %v439, 1
      %v583 = vpop.permute.xlu0 %582
      %v584 = vsel %vm560, %v581, %v583
      %v585 = vsel %vm560, %v583, %v581
      %v586 = vld [vmem:[%s563] sm:$0x3]
      %v588 = vperm.slane %v586, 0
      %v589 = vperm.slane %v586, 1
      %v592 = vmul.f32 %v585, %v588
      %v593 = vmul.f32 %v584, %v589
      %v596 = vrot.slane %v593, 7
      %v597 = vsel %vm428, %v592, %v596
      %s599 = scalar_lea.vmem [#allocation2], 7
      %600 = vst.msk [vmem:[%s599] ss:$8 sm:$0x3] %vm434, %v597
      %601 = vst.msk [vmem:[%s599] ss:$8 sm:$0x0] %vm434, %v597
      %s602 = scalar_lea.vmem %s2, 8
      %v603 = vld [vmem:[%s602] sm:$0x3]
      %v604 = vmul.f32 %v401, %v603
      %s605 = scalar_lea.vmem [#allocation2], 16
      %606 = vst.msk [vmem:[%s605] ss:$8 sm:$0x3] %vm434, %v604
      %607 = vst.msk [vmem:[%s605] ss:$8 sm:$0x0] %vm434, %v604
      %v608 = vld [vmem:[%s602] sm:$0x3]
      %v609 = vmul.f32 %v402, %v608
      %s610 = scalar_lea.vmem [#allocation2], 17
      %611 = vst.msk [vmem:[%s610] ss:$8 sm:$0x3] %vm434, %v609
      %612 = vst.msk [vmem:[%s610] ss:$8 sm:$0x0] %vm434, %v609
      %613 = vrot.lane.b32.xlu0 %v404, 127
      %v614 = vpop.permute.xlu0 %613
      %615 = vrot.lane.b32.xlu0 %v405, 127
      %v616 = vpop.permute.xlu0 %615
      %vm617 = vcmp.lt.s32.totalorder %v413, 127
      %v618 = vsel %vm617, %v614, %v616
      %v619 = vsel %vm617, %v616, %v614
      %s620 = scalar_lea.vmem %s2, 10
      %v621 = vld [vmem:[%s620] sm:$0x3]
      %v623 = vperm.slane %v621, 0
      %v624 = vperm.slane %v621, 1
      %v627 = vmul.f32 %v618, %v623
      %v628 = vmul.f32 %v619, %v624
      %v631 = vrot.slane %v628, 7
      %v632 = vsel %vm428, %v627, %v631
      %s634 = scalar_lea.vmem [#allocation2], 18
      %635 = vst.msk [vmem:[%s634] ss:$8 sm:$0x3] %vm434, %v632
      %636 = vst.msk [vmem:[%s634] ss:$8 sm:$0x0] %vm434, %v632
      %637 = vrot.lane.b32.xlu0 %v438, 127
      %v638 = vpop.permute.xlu0 %637
      %639 = vrot.lane.b32.xlu0 %v439, 127
      %v640 = vpop.permute.xlu0 %639
      %v641 = vsel %vm617, %v638, %v640
      %v642 = vsel %vm617, %v640, %v638
      %v643 = vld [vmem:[%s620] sm:$0x3]
      %v645 = vperm.slane %v643, 0
      %v646 = vperm.slane %v643, 1
      %v649 = vmul.f32 %v641, %v645
      %v650 = vmul.f32 %v642, %v646
      %v653 = vrot.slane %v650, 7
      %v654 = vsel %vm428, %v649, %v653
      %s656 = scalar_lea.vmem [#allocation2], 19
      %657 = vst.msk [vmem:[%s656] ss:$8 sm:$0x3] %vm434, %v654
      %658 = vst.msk [vmem:[%s656] ss:$8 sm:$0x0] %vm434, %v654
      %659 = vrot.lane.b32.xlu0 %v404, 113
      %v660 = vpop.permute.xlu0 %659
      %661 = vrot.lane.b32.xlu0 %v405, 113
      %v662 = vpop.permute.xlu0 %661
      %vm663 = vcmp.lt.s32.totalorder %v413, 113
      %v664 = vsel %vm663, %v660, %v662
      %v665 = vsel %vm663, %v662, %v660
      %s666 = scalar_lea.vmem %s2, 12
      %v667 = vld [vmem:[%s666] sm:$0x3]
      %v669 = vperm.slane %v667, 0
      %v670 = vperm.slane %v667, 1
      %v673 = vmul.f32 %v664, %v669
      %v674 = vmul.f32 %v665, %v670
      %v677 = vrot.slane %v674, 7
      %v678 = vsel %vm428, %v673, %v677
      %s680 = scalar_lea.vmem [#allocation2], 20
      %681 = vst.msk [vmem:[%s680] ss:$8 sm:$0x3] %vm434, %v678
      %682 = vst.msk [vmem:[%s680] ss:$8 sm:$0x0] %vm434, %v678
      %683 = vrot.lane.b32.xlu0 %v438, 113
      %v684 = vpop.permute.xlu0 %683
      %685 = vrot.lane.b32.xlu0 %v439, 113
      %v686 = vpop.permute.xlu0 %685
      %v687 = vsel %vm663, %v684, %v686
      %v688 = vsel %vm663, %v686, %v684
      %v689 = vld [vmem:[%s666] sm:$0x3]
      %v691 = vperm.slane %v689, 0
      %v692 = vperm.slane %v689, 1
      %v695 = vmul.f32 %v687, %v691
      %v696 = vmul.f32 %v688, %v692
      %v699 = vrot.slane %v696, 7
      %v700 = vsel %vm428, %v695, %v699
      %s702 = scalar_lea.vmem [#allocation2], 21
      %703 = vst.msk [vmem:[%s702] ss:$8 sm:$0x3] %vm434, %v700
      %704 = vst.msk [vmem:[%s702] ss:$8 sm:$0x0] %vm434, %v700
      %705 = vrot.lane.b32.xlu0 %v404, 112
      %v706 = vpop.permute.xlu0 %705
      %707 = vrot.lane.b32.xlu0 %v405, 112
      %v708 = vpop.permute.xlu0 %707
      %vm709 = vcmp.lt.s32.totalorder %v413, 112
      %v710 = vsel %vm709, %v706, %v708
      %v711 = vsel %vm709, %v708, %v706
      %s712 = scalar_lea.vmem %s2, 14
      %v713 = vld [vmem:[%s712] sm:$0x3]
      %v715 = vperm.slane %v713, 0
      %v716 = vperm.slane %v713, 1
      %v719 = vmul.f32 %v710, %v715
      %v720 = vmul.f32 %v711, %v716
      %v723 = vrot.slane %v720, 7
      %v724 = vsel %vm428, %v719, %v723
      %s726 = scalar_lea.vmem [#allocation2], 22
      %727 = vst.msk [vmem:[%s726] ss:$8 sm:$0x3] %vm434, %v724
      %728 = vst.msk [vmem:[%s726] ss:$8 sm:$0x0] %vm434, %v724
      %729 = vrot.lane.b32.xlu0 %v438, 112
      %v730 = vpop.permute.xlu0 %729
      %731 = vrot.lane.b32.xlu0 %v439, 112
      %v732 = vpop.permute.xlu0 %731
      %v733 = vsel %vm709, %v730, %v732
      %v734 = vsel %vm709, %v732, %v730
      %v735 = vld [vmem:[%s712] sm:$0x3]
      %v737 = vperm.slane %v735, 0
      %v738 = vperm.slane %v735, 1
      %v741 = vmul.f32 %v733, %v737
      %v742 = vmul.f32 %v734, %v738
      %v745 = vrot.slane %v742, 7
      %v746 = vsel %vm428, %v741, %v745
      %s748 = scalar_lea.vmem [#allocation2], 23
      %749 = vst.msk [vmem:[%s748] ss:$8 sm:$0x3] %vm434, %v746
      %750 = vst.msk [vmem:[%s748] ss:$8 sm:$0x0] %vm434, %v746
      %751 = vrot.lane.b32.xlu0 %v404, 111
      %v752 = vpop.permute.xlu0 %751
      %753 = vrot.lane.b32.xlu0 %v405, 111
      %v754 = vpop.permute.xlu0 %753
      %vm755 = vcmp.lt.s32.totalorder %v413, 111
      %v756 = vsel %vm755, %v752, %v754
      %v757 = vsel %vm755, %v754, %v752
      %s758 = scalar_lea.vmem %s2, 16
      %v759 = vld [vmem:[%s758] sm:$0x3]
      %v761 = vperm.slane %v759, 0
      %v762 = vperm.slane %v759, 1
      %v765 = vmul.f32 %v756, %v761
      %v766 = vmul.f32 %v757, %v762
      %v769 = vrot.slane %v766, 7
      %v770 = vsel %vm428, %v765, %v769
      %s772 = scalar_lea.vmem [#allocation2], 32
      %773 = vst.msk [vmem:[%s772] ss:$8 sm:$0x3] %vm434, %v770
      %774 = vst.msk [vmem:[%s772] ss:$8 sm:$0x0] %vm434, %v770
      %775 = vrot.lane.b32.xlu0 %v438, 111
      %v776 = vpop.permute.xlu0 %775
      %777 = vrot.lane.b32.xlu0 %v439, 111
      %v778 = vpop.permute.xlu0 %777
      %v779 = vsel %vm755, %v776, %v778
      %v780 = vsel %vm755, %v778, %v776
      %v781 = vld [vmem:[%s758] sm:$0x3]
      %v783 = vperm.slane %v781, 0
      %v784 = vperm.slane %v781, 1
      %v787 = vmul.f32 %v779, %v783
      %v788 = vmul.f32 %v780, %v784
      %v791 = vrot.slane %v788, 7
      %v792 = vsel %vm428, %v787, %v791
      %s794 = scalar_lea.vmem [#allocation2], 33
      %795 = vst.msk [vmem:[%s794] ss:$8 sm:$0x3] %vm434, %v792
      %796 = vst.msk [vmem:[%s794] ss:$8 sm:$0x0] %vm434, %v792
      %v797 = vld [vmem:[%s3] sm:$0xff]
      %v798 = vld [vmem:[%s3 + $0x8] sm:$0xff]
      %v799 = vld [vmem:[%s3 + $0x10] sm:$0xff]
      %v800 = vld [vmem:[%s3 + $0x18] sm:$0xff]
      %v801 = vld [vmem:[#allocation2] sm:$0xff]
      %v802 = vld [vmem:[#allocation2 + $0x8] sm:$0xff]
      %v803 = vld [vmem:[#allocation2 + $0x10] sm:$0xff]
      %v804 = vld [vmem:[#allocation2 + $0x18] sm:$0xff]
      %v805 = vld [vmem:[#allocation2 + $0x20] sm:$0x3]
      %v806 = vld [vmem:[#allocation2 + $0x28] sm:$0x3]
      %v807 = vld [vmem:[%s4] sm:$0xff]
      %v808 = vld [vmem:[%s4 + $0x8] sm:$0xff]
      %v809 = vld [vmem:[%s4 + $0x10] sm:$0xff]
      %v810 = vld [vmem:[%s4 + $0x18] sm:$0xff]
      %812 = vset.pattern.permute.xlu0 0
      %813 = vperm.xlu0 %812, %v807
      %v814 = vpop.permute.xlu0 %813
      %817 = vset.pattern.permute.xlu0 0
      %818 = vperm.xlu0 %817, %v808
      %v819 = vpop.permute.xlu0 %818
      %822 = vset.pattern.permute.xlu0 0
      %823 = vperm.xlu0 %822, %v809
      %v824 = vpop.permute.xlu0 %823
      %827 = vset.pattern.permute.xlu0 0
      %828 = vperm.xlu0 %827, %v810
      %v829 = vpop.permute.xlu0 %828
      %vm831 = vcmask 146432
      %v833 = vsel %vm831, %v797, 0
      %v836 = vsel %vm831, %v798, 0
      %v839 = vsel %vm831, %v799, 0
      %v842 = vsel %vm831, %v800, 0
      %vm844 = vcmask 1041408
      %v846 = vsel %vm844, %v805, 0
      %v849 = vsel %vm844, %v806, 0
      %851 = vmatpush.msra.mxu0 0.0
      %852 = vmatpush.msra.mxu0 0.0
      %853 = vmatpush.msra.mxu0 0.0
      %854 = vmatpush.msra.mxu0 0.0
      %855 = vmatpush.msra.mxu0 0.0
      %856 = vmatpush.msra.mxu0 0.0
      %857 = vmatpush.msra.mxu0 0.0
      %858 = vmatpush.msra.mxu0 0.0
      %859 = vmatpush.msra.mxu0 0.0
      %860 = vmatpush.msra.mxu0 0.0
      %861 = vmatpush.msra.mxu0 0.0
      %862 = vmatpush.msra.mxu0 0.0
      %863 = vmatpush.msra.mxu0 0.0
      %864 = vmatpush.msra.mxu0 %v846
      %865 = vmatpush.msra.mxu0 %v803
      %866 = vmatpush.msra.mxu0 %v801
      %867 = vmatmul.f32.gmra.mxu0 %v833
      %v868 = vpop.f32.mrf.mxu0
      %v869 = vadd.f32 %v814, %v868
      %870 = vmatmul.f32.gmra.mxu0 %v836
      %v871 = vpop.f32.mrf.mxu0
      %v872 = vadd.f32 %v819, %v871
      %873 = vmatmul.f32.gmra.mxu0 %v839
      %v874 = vpop.f32.mrf.mxu0
      %v875 = vadd.f32 %v824, %v874
      %876 = vmatmul.f32.gmra.mxu0 %v842
      %v877 = vpop.f32.mrf.mxu0
      %v878 = vadd.f32 %v829, %v877
      %879 = vdwg.mxu0
      %880 = vmatpush.msra.mxu0 0.0
      %881 = vmatpush.msra.mxu0 0.0
      %882 = vmatpush.msra.mxu0 0.0
      %883 = vmatpush.msra.mxu0 0.0
      %884 = vmatpush.msra.mxu0 0.0
      %885 = vmatpush.msra.mxu0 0.0
      %886 = vmatpush.msra.mxu0 0.0
      %887 = vmatpush.msra.mxu0 0.0
      %888 = vmatpush.msra.mxu0 0.0
      %889 = vmatpush.msra.mxu0 0.0
      %890 = vmatpush.msra.mxu0 0.0
      %891 = vmatpush.msra.mxu0 0.0
      %892 = vmatpush.msra.mxu0 0.0
      %893 = vmatpush.msra.mxu0 %v849
      %894 = vmatpush.msra.mxu0 %v804
      %895 = vmatpush.msra.mxu0 %v802
      %896 = vmatmul.f32.gmra.mxu0 %v833
      %v897 = vpop.f32.mrf.mxu0
      %v898 = vadd.f32 %v814, %v897
      %899 = vmatmul.f32.gmra.mxu0 %v836
      %v900 = vpop.f32.mrf.mxu0
      %v901 = vadd.f32 %v819, %v900
      %902 = vmatmul.f32.gmra.mxu0 %v839
      %v903 = vpop.f32.mrf.mxu0
      %v904 = vadd.f32 %v824, %v903
      %905 = vmatmul.f32.gmra.mxu0 %v842
      %v906 = vpop.f32.mrf.mxu0
      %v907 = vadd.f32 %v829, %v906
      %908 = vdwg.mxu0
      %vm909 = vcmp.ge.f32.partialorder %v869, 0.0
      %vm910 = vcmp.ge.f32.partialorder %v898, 0.0
      %vm911 = vcmp.ge.f32.partialorder %v872, 0.0
      %vm912 = vcmp.ge.f32.partialorder %v901, 0.0
      %vm913 = vcmp.ge.f32.partialorder %v875, 0.0
      %vm914 = vcmp.ge.f32.partialorder %v904, 0.0
      %vm915 = vcmp.ge.f32.partialorder %v878, 0.0
      %vm916 = vcmp.ge.f32.partialorder %v907, 0.0
      %v917 = vld [vmem:[%s5] sm:$0xff]
      %v918 = vld [vmem:[%s5 + $0x8] sm:$0xff]
      %v919 = vld [vmem:[%s5 + $0x10] sm:$0xff]
      %v920 = vld [vmem:[%s5 + $0x18] sm:$0xff]
      %922 = vset.pattern.permute.xlu0 0
      %923 = vperm.xlu0 %922, %v917
      %v924 = vpop.permute.xlu0 %923
      %927 = vset.pattern.permute.xlu0 0
      %928 = vperm.xlu0 %927, %v918
      %v929 = vpop.permute.xlu0 %928
      %932 = vset.pattern.permute.xlu0 0
      %933 = vperm.xlu0 %932, %v919
      %v934 = vpop.permute.xlu0 %933
      %937 = vset.pattern.permute.xlu0 0
      %938 = vperm.xlu0 %937, %v920
      %v939 = vpop.permute.xlu0 %938
      %v941 = vmul.f32 %v924, %v869
      %v942 = vmul.f32 %v924, %v898
      %v943 = vmul.f32 %v929, %v872
      %v944 = vmul.f32 %v929, %v901
      %v945 = vmul.f32 %v934, %v875
      %v946 = vmul.f32 %v934, %v904
      %v947 = vmul.f32 %v939, %v878
      %v948 = vmul.f32 %v939, %v907
      %v949 = vsel %vm909, %v869, %v941
      %v950 = vsel %vm910, %v898, %v942
      %v951 = vsel %vm911, %v872, %v943
      %v952 = vsel %vm912, %v901, %v944
      %v953 = vsel %vm913, %v875, %v945
      %v954 = vsel %vm914, %v904, %v946
      %v955 = vsel %vm915, %v878, %v947
      %v956 = vsel %vm916, %v907, %v948
      %957 = vrot.lane.b32.xlu0 %v949, 17
      %v958 = vpop.permute.xlu0 %957
      %959 = vrot.lane.b32.xlu0 %v951, 17
      %v960 = vpop.permute.xlu0 %959
      %961 = vrot.lane.b32.xlu0 %v953, 17
      %v962 = vpop.permute.xlu0 %961
      %963 = vrot.lane.b32.xlu0 %v955, 17
      %v964 = vpop.permute.xlu0 %963
      %965 = vrot.lane.b32.xlu0 %v950, 17
      %v966 = vpop.permute.xlu0 %965
      %967 = vrot.lane.b32.xlu0 %v952, 17
      %v968 = vpop.permute.xlu0 %967
      %969 = vrot.lane.b32.xlu0 %v954, 17
      %v970 = vpop.permute.xlu0 %969
      %971 = vrot.lane.b32.xlu0 %v956, 17
      %v972 = vpop.permute.xlu0 %971
      %v973 = vsel %vm414, %v958, %v966
      %v974 = vsel %vm414, %v960, %v968
      %v975 = vsel %vm414, %v962, %v970
      %v976 = vsel %vm414, %v964, %v972
      %v977 = vsel %vm414, %v966, %v958
      %v978 = vsel %vm414, %v968, %v960
      %v979 = vsel %vm414, %v970, %v962
      %v980 = vsel %vm414, %v972, %v964
      %v981 = vld [vmem:[%s2] sm:$0x3]
      %v983 = vperm.slane %v981, 0
      %v984 = vperm.slane %v981, 1
      %v987 = vmul.f32 %v977, %v983
      %v988 = vmul.f32 %v973, %v984
      %v989 = vmul.f32 %v978, %v983
      %v990 = vmul.f32 %v974, %v984
      %v991 = vmul.f32 %v979, %v983
      %v992 = vmul.f32 %v975, %v984
      %v993 = vmul.f32 %v980, %v983
      %v994 = vmul.f32 %v976, %v984
      %995 = vst [vmem:[#allocation3] sm:$0xff] %v987
      %996 = vst [vmem:[#allocation3 + $0x8] sm:$0xff] %v988
      %997 = vst [vmem:[#allocation3 + $0x10] sm:$0xff] %v989
      %998 = vst [vmem:[#allocation3 + $0x18] sm:$0xff] %v990
      %999 = vst [vmem:[#allocation3 + $0x20] sm:$0xff] %v991
      %1000 = vst [vmem:[#allocation3 + $0x28] sm:$0xff] %v992
      %1001 = vst [vmem:[#allocation3 + $0x30] sm:$0xff] %v993
      %1002 = vst [vmem:[#allocation3 + $0x38] sm:$0xff] %v994
      %1003 = vrot.lane.b32.xlu0 %v949, 16
      %v1004 = vpop.permute.xlu0 %1003
      %1005 = vrot.lane.b32.xlu0 %v951, 16
      %v1006 = vpop.permute.xlu0 %1005
      %1007 = vrot.lane.b32.xlu0 %v953, 16
      %v1008 = vpop.permute.xlu0 %1007
      %1009 = vrot.lane.b32.xlu0 %v955, 16
      %v1010 = vpop.permute.xlu0 %1009
      %1011 = vrot.lane.b32.xlu0 %v950, 16
      %v1012 = vpop.permute.xlu0 %1011
      %1013 = vrot.lane.b32.xlu0 %v952, 16
      %v1014 = vpop.permute.xlu0 %1013
      %1015 = vrot.lane.b32.xlu0 %v954, 16
      %v1016 = vpop.permute.xlu0 %1015
      %1017 = vrot.lane.b32.xlu0 %v956, 16
      %v1018 = vpop.permute.xlu0 %1017
      %v1019 = vsel %vm468, %v1004, %v1012
      %v1020 = vsel %vm468, %v1006, %v1014
      %v1021 = vsel %vm468, %v1008, %v1016
      %v1022 = vsel %vm468, %v1010, %v1018
      %v1023 = vsel %vm468, %v1012, %v1004
      %v1024 = vsel %vm468, %v1014, %v1006
      %v1025 = vsel %vm468, %v1016, %v1008
      %v1026 = vsel %vm468, %v1018, %v1010
      %v1027 = vld [vmem:[%s471] sm:$0x3]
      %v1029 = vperm.slane %v1027, 0
      %v1030 = vperm.slane %v1027, 1
      %v1033 = vmul.f32 %v1023, %v1029
      %v1034 = vmul.f32 %v1019, %v1030
      %v1035 = vmul.f32 %v1024, %v1029
      %v1036 = vmul.f32 %v1020, %v1030
      %v1037 = vmul.f32 %v1025, %v1029
      %v1038 = vmul.f32 %v1021, %v1030
      %v1039 = vmul.f32 %v1026, %v1029
      %v1040 = vmul.f32 %v1022, %v1030
      %1041 = vst [vmem:[#allocation3 + $0x40] sm:$0xff] %v1033
      %1042 = vst [vmem:[#allocation3 + $0x48] sm:$0xff] %v1034
      %1043 = vst [vmem:[#allocation3 + $0x50] sm:$0xff] %v1035
      %1044 = vst [vmem:[#allocation3 + $0x58] sm:$0xff] %v1036
      %1045 = vst [vmem:[#allocation3 + $0x60] sm:$0xff] %v1037
      %1046 = vst [vmem:[#allocation3 + $0x68] sm:$0xff] %v1038
      %1047 = vst [vmem:[#allocation3 + $0x70] sm:$0xff] %v1039
      %1048 = vst [vmem:[#allocation3 + $0x78] sm:$0xff] %v1040
      %1049 = vrot.lane.b32.xlu0 %v949, 15
      %v1050 = vpop.permute.xlu0 %1049
      %1051 = vrot.lane.b32.xlu0 %v951, 15
      %v1052 = vpop.permute.xlu0 %1051
      %1053 = vrot.lane.b32.xlu0 %v953, 15
      %v1054 = vpop.permute.xlu0 %1053
      %1055 = vrot.lane.b32.xlu0 %v955, 15
      %v1056 = vpop.permute.xlu0 %1055
      %1057 = vrot.lane.b32.xlu0 %v950, 15
      %v1058 = vpop.permute.xlu0 %1057
      %1059 = vrot.lane.b32.xlu0 %v952, 15
      %v1060 = vpop.permute.xlu0 %1059
      %1061 = vrot.lane.b32.xlu0 %v954, 15
      %v1062 = vpop.permute.xlu0 %1061
      %1063 = vrot.lane.b32.xlu0 %v956, 15
      %v1064 = vpop.permute.xlu0 %1063
      %v1065 = vsel %vm514, %v1050, %v1058
      %v1066 = vsel %vm514, %v1052, %v1060
      %v1067 = vsel %vm514, %v1054, %v1062
      %v1068 = vsel %vm514, %v1056, %v1064
      %v1069 = vsel %vm514, %v1058, %v1050
      %v1070 = vsel %vm514, %v1060, %v1052
      %v1071 = vsel %vm514, %v1062, %v1054
      %v1072 = vsel %vm514, %v1064, %v1056
      %v1073 = vld [vmem:[%s517] sm:$0x3]
      %v1075 = vperm.slane %v1073, 0
      %v1076 = vperm.slane %v1073, 1
      %v1079 = vmul.f32 %v1069, %v1075
      %v1080 = vmul.f32 %v1065, %v1076
      %v1081 = vmul.f32 %v1070, %v1075
      %v1082 = vmul.f32 %v1066, %v1076
      %v1083 = vmul.f32 %v1071, %v1075
      %v1084 = vmul.f32 %v1067, %v1076
      %v1085 = vmul.f32 %v1072, %v1075
      %v1086 = vmul.f32 %v1068, %v1076
      %1087 = vst [vmem:[#allocation3 + $0x80] sm:$0xff] %v1079
      %1088 = vst [vmem:[#allocation3 + $0x88] sm:$0xff] %v1080
      %1089 = vst [vmem:[#allocation3 + $0x90] sm:$0xff] %v1081
      %1090 = vst [vmem:[#allocation3 + $0x98] sm:$0xff] %v1082
      %1091 = vst [vmem:[#allocation3 + $0xa0] sm:$0xff] %v1083
      %1092 = vst [vmem:[#allocation3 + $0xa8] sm:$0xff] %v1084
      %1093 = vst [vmem:[#allocation3 + $0xb0] sm:$0xff] %v1085
      %1094 = vst [vmem:[#allocation3 + $0xb8] sm:$0xff] %v1086
      %1095 = vrot.lane.b32.xlu0 %v949, 1
      %v1096 = vpop.permute.xlu0 %1095
      %1097 = vrot.lane.b32.xlu0 %v951, 1
      %v1098 = vpop.permute.xlu0 %1097
      %1099 = vrot.lane.b32.xlu0 %v953, 1
      %v1100 = vpop.permute.xlu0 %1099
      %1101 = vrot.lane.b32.xlu0 %v955, 1
      %v1102 = vpop.permute.xlu0 %1101
      %1103 = vrot.lane.b32.xlu0 %v950, 1
      %v1104 = vpop.permute.xlu0 %1103
      %1105 = vrot.lane.b32.xlu0 %v952, 1
      %v1106 = vpop.permute.xlu0 %1105
      %1107 = vrot.lane.b32.xlu0 %v954, 1
      %v1108 = vpop.permute.xlu0 %1107
      %1109 = vrot.lane.b32.xlu0 %v956, 1
      %v1110 = vpop.permute.xlu0 %1109
      %v1111 = vsel %vm560, %v1096, %v1104
      %v1112 = vsel %vm560, %v1098, %v1106
      %v1113 = vsel %vm560, %v1100, %v1108
      %v1114 = vsel %vm560, %v1102, %v1110
      %v1115 = vsel %vm560, %v1104, %v1096
      %v1116 = vsel %vm560, %v1106, %v1098
      %v1117 = vsel %vm560, %v1108, %v1100
      %v1118 = vsel %vm560, %v1110, %v1102
      %v1119 = vld [vmem:[%s563] sm:$0x3]
      %v1121 = vperm.slane %v1119, 0
      %v1122 = vperm.slane %v1119, 1
      %v1125 = vmul.f32 %v1115, %v1121
      %v1126 = vmul.f32 %v1111, %v1122
      %v1127 = vmul.f32 %v1116, %v1121
      %v1128 = vmul.f32 %v1112, %v1122
      %v1129 = vmul.f32 %v1117, %v1121
      %v1130 = vmul.f32 %v1113, %v1122
      %v1131 = vmul.f32 %v1118, %v1121
      %v1132 = vmul.f32 %v1114, %v1122
      %1133 = vst [vmem:[#allocation3 + $0xc0] sm:$0xff] %v1125
      %1134 = vst [vmem:[#allocation3 + $0xc8] sm:$0xff] %v1126
      %1135 = vst [vmem:[#allocation3 + $0xd0] sm:$0xff] %v1127
      %1136 = vst [vmem:[#allocation3 + $0xd8] sm:$0xff] %v1128
      %1137 = vst [vmem:[#allocation3 + $0xe0] sm:$0xff] %v1129
      %1138 = vst [vmem:[#allocation3 + $0xe8] sm:$0xff] %v1130
      %1139 = vst [vmem:[#allocation3 + $0xf0] sm:$0xff] %v1131
      %1140 = vst [vmem:[#allocation3 + $0xf8] sm:$0xff] %v1132
      %v1141 = vld [vmem:[%s602] sm:$0x3]
      %v1143 = vperm.slane %v1141, 0
      %v1144 = vperm.slane %v1141, 1
      %v1147 = vmul.f32 %v949, %v1143
      %v1148 = vmul.f32 %v950, %v1144
      %v1149 = vmul.f32 %v951, %v1143
      %v1150 = vmul.f32 %v952, %v1144
      %v1151 = vmul.f32 %v953, %v1143
      %v1152 = vmul.f32 %v954, %v1144
      %v1153 = vmul.f32 %v955, %v1143
      %v1154 = vmul.f32 %v956, %v1144
      %1155 = vst [vmem:[#allocation3 + $0x100] sm:$0xff] %v1147
      %1156 = vst [vmem:[#allocation3 + $0x108] sm:$0xff] %v1148
      %1157 = vst [vmem:[#allocation3 + $0x110] sm:$0xff] %v1149
      %1158 = vst [vmem:[#allocation3 + $0x118] sm:$0xff] %v1150
      %1159 = vst [vmem:[#allocation3 + $0x120] sm:$0xff] %v1151
      %1160 = vst [vmem:[#allocation3 + $0x128] sm:$0xff] %v1152
      %1161 = vst [vmem:[#allocation3 + $0x130] sm:$0xff] %v1153
      %1162 = vst [vmem:[#allocation3 + $0x138] sm:$0xff] %v1154
      %1163 = vrot.lane.b32.xlu0 %v949, 127
      %v1164 = vpop.permute.xlu0 %1163
      %1165 = vrot.lane.b32.xlu0 %v951, 127
      %v1166 = vpop.permute.xlu0 %1165
      %1167 = vrot.lane.b32.xlu0 %v953, 127
      %v1168 = vpop.permute.xlu0 %1167
      %1169 = vrot.lane.b32.xlu0 %v955, 127
      %v1170 = vpop.permute.xlu0 %1169
      %1171 = vrot.lane.b32.xlu0 %v950, 127
      %v1172 = vpop.permute.xlu0 %1171
      %1173 = vrot.lane.b32.xlu0 %v952, 127
      %v1174 = vpop.permute.xlu0 %1173
      %1175 = vrot.lane.b32.xlu0 %v954, 127
      %v1176 = vpop.permute.xlu0 %1175
      %1177 = vrot.lane.b32.xlu0 %v956, 127
      %v1178 = vpop.permute.xlu0 %1177
      %v1179 = vsel %vm617, %v1164, %v1172
      %v1180 = vsel %vm617, %v1166, %v1174
      %v1181 = vsel %vm617, %v1168, %v1176
      %v1182 = vsel %vm617, %v1170, %v1178
      %v1183 = vsel %vm617, %v1172, %v1164
      %v1184 = vsel %vm617, %v1174, %v1166
      %v1185 = vsel %vm617, %v1176, %v1168
      %v1186 = vsel %vm617, %v1178, %v1170
      %v1187 = vld [vmem:[%s620] sm:$0x3]
      %v1189 = vperm.slane %v1187, 0
      %v1190 = vperm.slane %v1187, 1
      %v1193 = vmul.f32 %v1179, %v1189
      %v1194 = vmul.f32 %v1183, %v1190
      %v1195 = vmul.f32 %v1180, %v1189
      %v1196 = vmul.f32 %v1184, %v1190
      %v1197 = vmul.f32 %v1181, %v1189
      %v1198 = vmul.f32 %v1185, %v1190
      %v1199 = vmul.f32 %v1182, %v1189
      %v1200 = vmul.f32 %v1186, %v1190
      %1201 = vst [vmem:[#allocation3 + $0x140] sm:$0xff] %v1193
      %1202 = vst [vmem:[#allocation3 + $0x148] sm:$0xff] %v1194
      %1203 = vst [vmem:[#allocation3 + $0x150] sm:$0xff] %v1195
      %1204 = vst [vmem:[#allocation3 + $0x158] sm:$0xff] %v1196
      %1205 = vst [vmem:[#allocation3 + $0x160] sm:$0xff] %v1197
      %1206 = vst [vmem:[#allocation3 + $0x168] sm:$0xff] %v1198
      %1207 = vst [vmem:[#allocation3 + $0x170] sm:$0xff] %v1199
      %1208 = vst [vmem:[#allocation3 + $0x178] sm:$0xff] %v1200
      %1209 = vrot.lane.b32.xlu0 %v949, 113
      %v1210 = vpop.permute.xlu0 %1209
      %1211 = vrot.lane.b32.xlu0 %v951, 113
      %v1212 = vpop.permute.xlu0 %1211
      %1213 = vrot.lane.b32.xlu0 %v953, 113
      %v1214 = vpop.permute.xlu0 %1213
      %1215 = vrot.lane.b32.xlu0 %v955, 113
      %v1216 = vpop.permute.xlu0 %1215
      %1217 = vrot.lane.b32.xlu0 %v950, 113
      %v1218 = vpop.permute.xlu0 %1217
      %1219 = vrot.lane.b32.xlu0 %v952, 113
      %v1220 = vpop.permute.xlu0 %1219
      %1221 = vrot.lane.b32.xlu0 %v954, 113
      %v1222 = vpop.permute.xlu0 %1221
      %1223 = vrot.lane.b32.xlu0 %v956, 113
      %v1224 = vpop.permute.xlu0 %1223
      %v1225 = vsel %vm663, %v1210, %v1218
      %v1226 = vsel %vm663, %v1212, %v1220
      %v1227 = vsel %vm663, %v1214, %v1222
      %v1228 = vsel %vm663, %v1216, %v1224
      %v1229 = vsel %vm663, %v1218, %v1210
      %v1230 = vsel %vm663, %v1220, %v1212
      %v1231 = vsel %vm663, %v1222, %v1214
      %v1232 = vsel %vm663, %v1224, %v1216
      %v1233 = vld [vmem:[%s666] sm:$0x3]
      %v1235 = vperm.slane %v1233, 0
      %v1236 = vperm.slane %v1233, 1
      %v1239 = vmul.f32 %v1225, %v1235
      %v1240 = vmul.f32 %v1229, %v1236
      %v1241 = vmul.f32 %v1226, %v1235
      %v1242 = vmul.f32 %v1230, %v1236
      %v1243 = vmul.f32 %v1227, %v1235
      %v1244 = vmul.f32 %v1231, %v1236
      %v1245 = vmul.f32 %v1228, %v1235
      %v1246 = vmul.f32 %v1232, %v1236
      %1247 = vst [vmem:[#allocation3 + $0x180] sm:$0xff] %v1239
      %1248 = vst [vmem:[#allocation3 + $0x188] sm:$0xff] %v1240
      %1249 = vst [vmem:[#allocation3 + $0x190] sm:$0xff] %v1241
      %1250 = vst [vmem:[#allocation3 + $0x198] sm:$0xff] %v1242
      %1251 = vst [vmem:[#allocation3 + $0x1a0] sm:$0xff] %v1243
      %1252 = vst [vmem:[#allocation3 + $0x1a8] sm:$0xff] %v1244
      %1253 = vst [vmem:[#allocation3 + $0x1b0] sm:$0xff] %v1245
      %1254 = vst [vmem:[#allocation3 + $0x1b8] sm:$0xff] %v1246
      %1255 = vrot.lane.b32.xlu0 %v949, 112
      %v1256 = vpop.permute.xlu0 %1255
      %1257 = vrot.lane.b32.xlu0 %v951, 112
      %v1258 = vpop.permute.xlu0 %1257
      %1259 = vrot.lane.b32.xlu0 %v953, 112
      %v1260 = vpop.permute.xlu0 %1259
      %1261 = vrot.lane.b32.xlu0 %v955, 112
      %v1262 = vpop.permute.xlu0 %1261
      %1263 = vrot.lane.b32.xlu0 %v950, 112
      %v1264 = vpop.permute.xlu0 %1263
      %1265 = vrot.lane.b32.xlu0 %v952, 112
      %v1266 = vpop.permute.xlu0 %1265
      %1267 = vrot.lane.b32.xlu0 %v954, 112
      %v1268 = vpop.permute.xlu0 %1267
      %1269 = vrot.lane.b32.xlu0 %v956, 112
      %v1270 = vpop.permute.xlu0 %1269
      %v1271 = vsel %vm709, %v1256, %v1264
      %v1272 = vsel %vm709, %v1258, %v1266
      %v1273 = vsel %vm709, %v1260, %v1268
      %v1274 = vsel %vm709, %v1262, %v1270
      %v1275 = vsel %vm709, %v1264, %v1256
      %v1276 = vsel %vm709, %v1266, %v1258
      %v1277 = vsel %vm709, %v1268, %v1260
      %v1278 = vsel %vm709, %v1270, %v1262
      %v1279 = vld [vmem:[%s712] sm:$0x3]
      %v1281 = vperm.slane %v1279, 0
      %v1282 = vperm.slane %v1279, 1
      %v1285 = vmul.f32 %v1271, %v1281
      %v1286 = vmul.f32 %v1275, %v1282
      %v1287 = vmul.f32 %v1272, %v1281
      %v1288 = vmul.f32 %v1276, %v1282
      %v1289 = vmul.f32 %v1273, %v1281
      %v1290 = vmul.f32 %v1277, %v1282
      %v1291 = vmul.f32 %v1274, %v1281
      %v1292 = vmul.f32 %v1278, %v1282
      %1293 = vst [vmem:[#allocation3 + $0x1c0] sm:$0xff] %v1285
      %1294 = vst [vmem:[#allocation3 + $0x1c8] sm:$0xff] %v1286
      %1295 = vst [vmem:[#allocation3 + $0x1d0] sm:$0xff] %v1287
      %1296 = vst [vmem:[#allocation3 + $0x1d8] sm:$0xff] %v1288
      %1297 = vst [vmem:[#allocation3 + $0x1e0] sm:$0xff] %v1289
      %1298 = vst [vmem:[#allocation3 + $0x1e8] sm:$0xff] %v1290
      %1299 = vst [vmem:[#allocation3 + $0x1f0] sm:$0xff] %v1291
      %1300 = vst [vmem:[#allocation3 + $0x1f8] sm:$0xff] %v1292
      %1301 = vrot.lane.b32.xlu0 %v949, 111
      %v1302 = vpop.permute.xlu0 %1301
      %1303 = vrot.lane.b32.xlu0 %v951, 111
      %v1304 = vpop.permute.xlu0 %1303
      %1305 = vrot.lane.b32.xlu0 %v953, 111
      %v1306 = vpop.permute.xlu0 %1305
      %1307 = vrot.lane.b32.xlu0 %v955, 111
      %v1308 = vpop.permute.xlu0 %1307
      %1309 = vrot.lane.b32.xlu0 %v950, 111
      %v1310 = vpop.permute.xlu0 %1309
      %1311 = vrot.lane.b32.xlu0 %v952, 111
      %v1312 = vpop.permute.xlu0 %1311
      %1313 = vrot.lane.b32.xlu0 %v954, 111
      %v1314 = vpop.permute.xlu0 %1313
      %1315 = vrot.lane.b32.xlu0 %v956, 111
      %v1316 = vpop.permute.xlu0 %1315
      %v1317 = vsel %vm755, %v1302, %v1310
      %v1318 = vsel %vm755, %v1304, %v1312
      %v1319 = vsel %vm755, %v1306, %v1314
      %v1320 = vsel %vm755, %v1308, %v1316
      %v1321 = vsel %vm755, %v1310, %v1302
      %v1322 = vsel %vm755, %v1312, %v1304
      %v1323 = vsel %vm755, %v1314, %v1306
      %v1324 = vsel %vm755, %v1316, %v1308
      %v1325 = vld [vmem:[%s758] sm:$0x3]
      %v1327 = vperm.slane %v1325, 0
      %v1328 = vperm.slane %v1325, 1
      %v1331 = vmul.f32 %v1317, %v1327
      %v1332 = vmul.f32 %v1321, %v1328
      %v1333 = vmul.f32 %v1318, %v1327
      %v1334 = vmul.f32 %v1322, %v1328
      %v1335 = vmul.f32 %v1319, %v1327
      %v1336 = vmul.f32 %v1323, %v1328
      %v1337 = vmul.f32 %v1320, %v1327
      %v1338 = vmul.f32 %v1324, %v1328
      %1339 = vst [vmem:[#allocation3 + $0x200] sm:$0xff] %v1331
      %1340 = vst [vmem:[#allocation3 + $0x208] sm:$0xff] %v1332
      %1341 = vst [vmem:[#allocation3 + $0x210] sm:$0xff] %v1333
      %1342 = vst [vmem:[#allocation3 + $0x218] sm:$0xff] %v1334
      %1343 = vst [vmem:[#allocation3 + $0x220] sm:$0xff] %v1335
      %1344 = vst [vmem:[#allocation3 + $0x228] sm:$0xff] %v1336
      %1345 = vst [vmem:[#allocation3 + $0x230] sm:$0xff] %v1337
      %1346 = vst [vmem:[#allocation3 + $0x238] sm:$0xff] %v1338
      %v1347 = vld [vmem:[%s6] sm:$0xff]
      %v1348 = vld [vmem:[%s6 + $0x8] sm:$0xff]
      %v1349 = vld [vmem:[%s6 + $0x10] sm:$0xff]
      %v1350 = vld [vmem:[%s6 + $0x18] sm:$0xff]
      %v1351 = vld [vmem:[%s6 + $0x20] sm:$0xff]
      %v1352 = vld [vmem:[%s6 + $0x28] sm:$0xff]
      %v1353 = vld [vmem:[%s6 + $0x30] sm:$0xff]
      %v1354 = vld [vmem:[%s6 + $0x38] sm:$0xff]
      %v1355 = vld [vmem:[%s6 + $0x40] sm:$0xff]
      %v1356 = vld [vmem:[%s6 + $0x48] sm:$0xff]
      %v1357 = vld [vmem:[%s6 + $0x50] sm:$0xff]
      %v1358 = vld [vmem:[%s6 + $0x58] sm:$0xff]
      %v1359 = vld [vmem:[#allocation3] sm:$0xff]
      %v1360 = vld [vmem:[#allocation3 + $0x8] sm:$0xff]
      %v1361 = vld [vmem:[#allocation3 + $0x10] sm:$0xff]
      %v1362 = vld [vmem:[#allocation3 + $0x18] sm:$0xff]
      %v1363 = vld [vmem:[#allocation3 + $0x20] sm:$0xff]
      %v1364 = vld [vmem:[#allocation3 + $0x28] sm:$0xff]
      %v1365 = vld [vmem:[#allocation3 + $0x30] sm:$0xff]
      %v1366 = vld [vmem:[#allocation3 + $0x38] sm:$0xff]
      %v1367 = vld [vmem:[#allocation3 + $0x40] sm:$0xff]
      %v1368 = vld [vmem:[#allocation3 + $0x48] sm:$0xff]
      %v1369 = vld [vmem:[#allocation3 + $0x50] sm:$0xff]
      %v1370 = vld [vmem:[#allocation3 + $0x58] sm:$0xff]
      %v1371 = vld [vmem:[#allocation3 + $0x60] sm:$0xff]
      %v1372 = vld [vmem:[#allocation3 + $0x68] sm:$0xff]
      %v1373 = vld [vmem:[#allocation3 + $0x70] sm:$0xff]
      %v1374 = vld [vmem:[#allocation3 + $0x78] sm:$0xff]
      %v1375 = vld [vmem:[#allocation3 + $0x80] sm:$0xff]
      %v1376 = vld [vmem:[#allocation3 + $0x88] sm:$0xff]
      %v1377 = vld [vmem:[#allocation3 + $0x90] sm:$0xff]
      %v1378 = vld [vmem:[#allocation3 + $0x98] sm:$0xff]
      %v1379 = vld [vmem:[#allocation3 + $0xa0] sm:$0xff]
      %v1380 = vld [vmem:[#allocation3 + $0xa8] sm:$0xff]
      %v1381 = vld [vmem:[#allocation3 + $0xb0] sm:$0xff]
      %v1382 = vld [vmem:[#allocation3 + $0xb8] sm:$0xff]
      %v1383 = vld [vmem:[#allocation3 + $0xc0] sm:$0xff]
      %v1384 = vld [vmem:[#allocation3 + $0xc8] sm:$0xff]
      %v1385 = vld [vmem:[#allocation3 + $0xd0] sm:$0xff]
      %v1386 = vld [vmem:[#allocation3 + $0xd8] sm:$0xff]
      %v1387 = vld [vmem:[#allocation3 + $0xe0] sm:$0xff]
      %v1388 = vld [vmem:[#allocation3 + $0xe8] sm:$0xff]
      %v1389 = vld [vmem:[#allocation3 + $0xf0] sm:$0xff]
      %v1390 = vld [vmem:[#allocation3 + $0xf8] sm:$0xff]
      %v1391 = vld [vmem:[#allocation3 + $0x100] sm:$0xff]
      %v1392 = vld [vmem:[#allocation3 + $0x108] sm:$0xff]
      %v1393 = vld [vmem:[#allocation3 + $0x110] sm:$0xff]
      %v1394 = vld [vmem:[#allocation3 + $0x118] sm:$0xff]
      %v1395 = vld [vmem:[#allocation3 + $0x120] sm:$0xff]
      %v1396 = vld [vmem:[#allocation3 + $0x128] sm:$0xff]
      %v1397 = vld [vmem:[#allocation3 + $0x130] sm:$0xff]
      %v1398 = vld [vmem:[#allocation3 + $0x138] sm:$0xff]
      %v1399 = vld [vmem:[#allocation3 + $0x140] sm:$0xff]
      %v1400 = vld [vmem:[#allocation3 + $0x148] sm:$0xff]
      %v1401 = vld [vmem:[#allocation3 + $0x150] sm:$0xff]
      %v1402 = vld [vmem:[#allocation3 + $0x158] sm:$0xff]
      %v1403 = vld [vmem:[#allocation3 + $0x160] sm:$0xff]
      %v1404 = vld [vmem:[#allocation3 + $0x168] sm:$0xff]
      %v1405 = vld [vmem:[#allocation3 + $0x170] sm:$0xff]
      %v1406 = vld [vmem:[#allocation3 + $0x178] sm:$0xff]
      %v1407 = vld [vmem:[#allocation3 + $0x180] sm:$0xff]
      %v1408 = vld [vmem:[#allocation3 + $0x188] sm:$0xff]
      %v1409 = vld [vmem:[#allocation3 + $0x190] sm:$0xff]
      %v1410 = vld [vmem:[#allocation3 + $0x198] sm:$0xff]
      %v1411 = vld [vmem:[#allocation3 + $0x1a0] sm:$0xff]
      %v1412 = vld [vmem:[#allocation3 + $0x1a8] sm:$0xff]
      %v1413 = vld [vmem:[#allocation3 + $0x1b0] sm:$0xff]
      %v1414 = vld [vmem:[#allocation3 + $0x1b8] sm:$0xff]
      %v1415 = vld [vmem:[#allocation3 + $0x1c0] sm:$0xff]
      %v1416 = vld [vmem:[#allocation3 + $0x1c8] sm:$0xff]
      %v1417 = vld [vmem:[#allocation3 + $0x1d0] sm:$0xff]
      %v1418 = vld [vmem:[#allocation3 + $0x1d8] sm:$0xff]
      %v1419 = vld [vmem:[#allocation3 + $0x1e0] sm:$0xff]
      %v1420 = vld [vmem:[#allocation3 + $0x1e8] sm:$0xff]
      %v1421 = vld [vmem:[#allocation3 + $0x1f0] sm:$0xff]
      %v1422 = vld [vmem:[#allocation3 + $0x1f8] sm:$0xff]
      %v1423 = vld [vmem:[#allocation3 + $0x200] sm:$0xff]
      %v1424 = vld [vmem:[#allocation3 + $0x208] sm:$0xff]
      %v1425 = vld [vmem:[#allocation3 + $0x210] sm:$0xff]
      %v1426 = vld [vmem:[#allocation3 + $0x218] sm:$0xff]
      %v1427 = vld [vmem:[#allocation3 + $0x220] sm:$0xff]
      %v1428 = vld [vmem:[#allocation3 + $0x228] sm:$0xff]
      %v1429 = vld [vmem:[#allocation3 + $0x230] sm:$0xff]
      %v1430 = vld [vmem:[#allocation3 + $0x238] sm:$0xff]
      %v1431 = vld [vmem:[%s7] sm:$0xff]
      %v1432 = vld [vmem:[%s7 + $0x8] sm:$0xff]
      %v1433 = vld [vmem:[%s7 + $0x10] sm:$0xff]
      %v1434 = vld [vmem:[%s7 + $0x18] sm:$0xff]
      %1436 = vset.pattern.permute.xlu0 0
      %1437 = vperm.xlu0 %1436, %v1431
      %v1438 = vpop.permute.xlu0 %1437
      %1441 = vset.pattern.permute.xlu0 0
      %1442 = vperm.xlu0 %1441, %v1432
      %v1443 = vpop.permute.xlu0 %1442
      %1446 = vset.pattern.permute.xlu0 0
      %1447 = vperm.xlu0 %1446, %v1433
      %v1448 = vpop.permute.xlu0 %1447
      %1451 = vset.pattern.permute.xlu0 0
      %1452 = vperm.xlu0 %1451, %v1434
      %v1453 = vpop.permute.xlu0 %1452
      %vm1455 = vcmask 261120
      %v1457 = vsel %vm1455, %v1349, 0
      %v1460 = vsel %vm1455, %v1352, 0
      %v1463 = vsel %vm1455, %v1355, 0
      %v1466 = vsel %vm1455, %v1358, 0
      %1468 = vmatpush.msra.mxu0 %v1389
      %1469 = vmatpush.msra.mxu0 %v1387
      %1470 = vmatpush.msra.mxu0 %v1385
      %1471 = vmatpush.msra.mxu0 %v1383
      %1472 = vmatpush.msra.mxu0 %v1381
      %1473 = vmatpush.msra.mxu0 %v1379
      %1474 = vmatpush.msra.mxu0 %v1377
      %1475 = vmatpush.msra.mxu0 %v1375
      %1476 = vmatpush.msra.mxu0 %v1373
      %1477 = vmatpush.msra.mxu0 %v1371
      %1478 = vmatpush.msra.mxu0 %v1369
      %1479 = vmatpush.msra.mxu0 %v1367
      %1480 = vmatpush.msra.mxu0 %v1365
      %1481 = vmatpush.msra.mxu0 %v1363
      %1482 = vmatpush.msra.mxu0 %v1361
      %1483 = vmatpush.msra.mxu0 %v1359
      %1484 = vmatmul.f32.gmra.mxu0 %v1347
      %v1485 = vpop.f32.mrf.mxu0
      %v1486 = vadd.f32 %v1438, %v1485
      %1487 = vmatmul.f32.gmra.mxu0 %v1350
      %v1488 = vpop.f32.mrf.mxu0
      %v1489 = vadd.f32 %v1443, %v1488
      %1490 = vmatmul.f32.gmra.mxu0 %v1353
      %v1491 = vpop.f32.mrf.mxu0
      %v1492 = vadd.f32 %v1448, %v1491
      %1493 = vmatmul.f32.gmra.mxu0 %v1356
      %v1494 = vpop.f32.mrf.mxu0
      %v1495 = vadd.f32 %v1453, %v1494
      %1496 = vdwg.mxu0
      %1497 = vmatpush.msra.mxu0 %v1421
      %1498 = vmatpush.msra.mxu0 %v1419
      %1499 = vmatpush.msra.mxu0 %v1417
      %1500 = vmatpush.msra.mxu0 %v1415
      %1501 = vmatpush.msra.mxu0 %v1413
      %1502 = vmatpush.msra.mxu0 %v1411
      %1503 = vmatpush.msra.mxu0 %v1409
      %1504 = vmatpush.msra.mxu0 %v1407
      %1505 = vmatpush.msra.mxu0 %v1405
      %1506 = vmatpush.msra.mxu0 %v1403
      %1507 = vmatpush.msra.mxu0 %v1401
      %1508 = vmatpush.msra.mxu0 %v1399
      %1509 = vmatpush.msra.mxu0 %v1397
      %1510 = vmatpush.msra.mxu0 %v1395
      %1511 = vmatpush.msra.mxu0 %v1393
      %1512 = vmatpush.msra.mxu0 %v1391
      %1513 = vmatmul.f32.gmra.mxu0 %v1348
      %v1514 = vpop.f32.mrf.mxu0
      %v1515 = vadd.f32 %v1486, %v1514
      %1516 = vmatmul.f32.gmra.mxu0 %v1351
      %v1517 = vpop.f32.mrf.mxu0
      %v1518 = vadd.f32 %v1489, %v1517
      %1519 = vmatmul.f32.gmra.mxu0 %v1354
      %v1520 = vpop.f32.mrf.mxu0
      %v1521 = vadd.f32 %v1492, %v1520
      %1522 = vmatmul.f32.gmra.mxu0 %v1357
      %v1523 = vpop.f32.mrf.mxu0
      %v1524 = vadd.f32 %v1495, %v1523
      %1525 = vdwg.mxu0
      %1526 = vmatpush.msra.mxu0 0.0
      %1527 = vmatpush.msra.mxu0 0.0
      %1528 = vmatpush.msra.mxu0 0.0
      %1529 = vmatpush.msra.mxu0 0.0
      %1530 = vmatpush.msra.mxu0 0.0
      %1531 = vmatpush.msra.mxu0 0.0
      %1532 = vmatpush.msra.mxu0 0.0
      %1533 = vmatpush.msra.mxu0 0.0
      %1534 = vmatpush.msra.mxu0 0.0
      %1535 = vmatpush.msra.mxu0 0.0
      %1536 = vmatpush.msra.mxu0 0.0
      %1537 = vmatpush.msra.mxu0 0.0
      %1538 = vmatpush.msra.mxu0 %v1429
      %1539 = vmatpush.msra.mxu0 %v1427
      %1540 = vmatpush.msra.mxu0 %v1425
      %1541 = vmatpush.msra.mxu0 %v1423
      %1542 = vmatmul.f32.gmra.mxu0 %v1457
      %v1543 = vpop.f32.mrf.mxu0
      %v1544 = vadd.f32 %v1515, %v1543
      %1545 = vmatmul.f32.gmra.mxu0 %v1460
      %v1546 = vpop.f32.mrf.mxu0
      %v1547 = vadd.f32 %v1518, %v1546
      %1548 = vmatmul.f32.gmra.mxu0 %v1463
      %v1549 = vpop.f32.mrf.mxu0
      %v1550 = vadd.f32 %v1521, %v1549
      %1551 = vmatmul.f32.gmra.mxu0 %v1466
      %v1552 = vpop.f32.mrf.mxu0
      %v1553 = vadd.f32 %v1524, %v1552
      %1554 = vdwg.mxu0
      %1555 = vmatpush.msra.mxu0 %v1390
      %1556 = vmatpush.msra.mxu0 %v1388
      %1557 = vmatpush.msra.mxu0 %v1386
      %1558 = vmatpush.msra.mxu0 %v1384
      %1559 = vmatpush.msra.mxu0 %v1382
      %1560 = vmatpush.msra.mxu0 %v1380
      %1561 = vmatpush.msra.mxu0 %v1378
      %1562 = vmatpush.msra.mxu0 %v1376
      %1563 = vmatpush.msra.mxu0 %v1374
      %1564 = vmatpush.msra.mxu0 %v1372
      %1565 = vmatpush.msra.mxu0 %v1370
      %1566 = vmatpush.msra.mxu0 %v1368
      %1567 = vmatpush.msra.mxu0 %v1366
      %1568 = vmatpush.msra.mxu0 %v1364
      %1569 = vmatpush.msra.mxu0 %v1362
      %1570 = vmatpush.msra.mxu0 %v1360
      %1571 = vmatmul.f32.gmra.mxu0 %v1347
      %v1572 = vpop.f32.mrf.mxu0
      %v1573 = vadd.f32 %v1438, %v1572
      %1574 = vmatmul.f32.gmra.mxu0 %v1350
      %v1575 = vpop.f32.mrf.mxu0
      %v1576 = vadd.f32 %v1443, %v1575
      %1577 = vmatmul.f32.gmra.mxu0 %v1353
      %v1578 = vpop.f32.mrf.mxu0
      %v1579 = vadd.f32 %v1448, %v1578
      %1580 = vmatmul.f32.gmra.mxu0 %v1356
      %v1581 = vpop.f32.mrf.mxu0
      %v1582 = vadd.f32 %v1453, %v1581
      %1583 = vdwg.mxu0
      %1584 = vmatpush.msra.mxu0 %v1422
      %1585 = vmatpush.msra.mxu0 %v1420
      %1586 = vmatpush.msra.mxu0 %v1418
      %1587 = vmatpush.msra.mxu0 %v1416
      %1588 = vmatpush.msra.mxu0 %v1414
      %1589 = vmatpush.msra.mxu0 %v1412
      %1590 = vmatpush.msra.mxu0 %v1410
      %1591 = vmatpush.msra.mxu0 %v1408
      %1592 = vmatpush.msra.mxu0 %v1406
      %1593 = vmatpush.msra.mxu0 %v1404
      %1594 = vmatpush.msra.mxu0 %v1402
      %1595 = vmatpush.msra.mxu0 %v1400
      %1596 = vmatpush.msra.mxu0 %v1398
      %1597 = vmatpush.msra.mxu0 %v1396
      %1598 = vmatpush.msra.mxu0 %v1394
      %1599 = vmatpush.msra.mxu0 %v1392
      %1600 = vmatmul.f32.gmra.mxu0 %v1348
      %v1601 = vpop.f32.mrf.mxu0
      %v1602 = vadd.f32 %v1573, %v1601
      %1603 = vmatmul.f32.gmra.mxu0 %v1351
      %v1604 = vpop.f32.mrf.mxu0
      %v1605 = vadd.f32 %v1576, %v1604
      %1606 = vmatmul.f32.gmra.mxu0 %v1354
      %v1607 = vpop.f32.mrf.mxu0
      %v1608 = vadd.f32 %v1579, %v1607
      %1609 = vmatmul.f32.gmra.mxu0 %v1357
      %v1610 = vpop.f32.mrf.mxu0
      %v1611 = vadd.f32 %v1582, %v1610
      %1612 = vdwg.mxu0
      %1613 = vmatpush.msra.mxu0 0.0
      %1614 = vmatpush.msra.mxu0 0.0
      %1615 = vmatpush.msra.mxu0 0.0
      %1616 = vmatpush.msra.mxu0 0.0
      %1617 = vmatpush.msra.mxu0 0.0
      %1618 = vmatpush.msra.mxu0 0.0
      %1619 = vmatpush.msra.mxu0 0.0
      %1620 = vmatpush.msra.mxu0 0.0
      %1621 = vmatpush.msra.mxu0 0.0
      %1622 = vmatpush.msra.mxu0 0.0
      %1623 = vmatpush.msra.mxu0 0.0
      %1624 = vmatpush.msra.mxu0 0.0
      %1625 = vmatpush.msra.mxu0 %v1430
      %1626 = vmatpush.msra.mxu0 %v1428
      %1627 = vmatpush.msra.mxu0 %v1426
      %1628 = vmatpush.msra.mxu0 %v1424
      %1629 = vmatmul.f32.gmra.mxu0 %v1457
      %v1630 = vpop.f32.mrf.mxu0
      %v1631 = vadd.f32 %v1602, %v1630
      %1632 = vmatmul.f32.gmra.mxu0 %v1460
      %v1633 = vpop.f32.mrf.mxu0
      %v1634 = vadd.f32 %v1605, %v1633
      %1635 = vmatmul.f32.gmra.mxu0 %v1463
      %v1636 = vpop.f32.mrf.mxu0
      %v1637 = vadd.f32 %v1608, %v1636
      %1638 = vmatmul.f32.gmra.mxu0 %v1466
      %v1639 = vpop.f32.mrf.mxu0
      %v1640 = vadd.f32 %v1611, %v1639
      %1641 = vdwg.mxu0
      %vm1642 = vcmp.ge.f32.partialorder %v1544, 0.0
      %vm1643 = vcmp.ge.f32.partialorder %v1631, 0.0
      %vm1644 = vcmp.ge.f32.partialorder %v1547, 0.0
      %vm1645 = vcmp.ge.f32.partialorder %v1634, 0.0
      %vm1646 = vcmp.ge.f32.partialorder %v1550, 0.0
      %vm1647 = vcmp.ge.f32.partialorder %v1637, 0.0
      %vm1648 = vcmp.ge.f32.partialorder %v1553, 0.0
      %vm1649 = vcmp.ge.f32.partialorder %v1640, 0.0
      %v1650 = vld [vmem:[%s8] sm:$0xff]
      %v1651 = vld [vmem:[%s8 + $0x8] sm:$0xff]
      %v1652 = vld [vmem:[%s8 + $0x10] sm:$0xff]
      %v1653 = vld [vmem:[%s8 + $0x18] sm:$0xff]
      %1655 = vset.pattern.permute.xlu0 0
      %1656 = vperm.xlu0 %1655, %v1650
      %v1657 = vpop.permute.xlu0 %1656
      %1660 = vset.pattern.permute.xlu0 0
      %1661 = vperm.xlu0 %1660, %v1651
      %v1662 = vpop.permute.xlu0 %1661
      %1665 = vset.pattern.permute.xlu0 0
      %1666 = vperm.xlu0 %1665, %v1652
      %v1667 = vpop.permute.xlu0 %1666
      %1670 = vset.pattern.permute.xlu0 0
      %1671 = vperm.xlu0 %1670, %v1653
      %v1672 = vpop.permute.xlu0 %1671
      %v1674 = vmul.f32 %v1657, %v1544
      %v1675 = vmul.f32 %v1657, %v1631
      %v1676 = vmul.f32 %v1662, %v1547
      %v1677 = vmul.f32 %v1662, %v1634
      %v1678 = vmul.f32 %v1667, %v1550
      %v1679 = vmul.f32 %v1667, %v1637
      %v1680 = vmul.f32 %v1672, %v1553
      %v1681 = vmul.f32 %v1672, %v1640
      %v1682 = vsel %vm1642, %v1544, %v1674
      %v1683 = vsel %vm1643, %v1631, %v1675
      %v1684 = vsel %vm1644, %v1547, %v1676
      %v1685 = vsel %vm1645, %v1634, %v1677
      %v1686 = vsel %vm1646, %v1550, %v1678
      %v1687 = vsel %vm1647, %v1637, %v1679
      %v1688 = vsel %vm1648, %v1553, %v1680
      %v1689 = vsel %vm1649, %v1640, %v1681
      %v1690 = vld [vmem:[%s9] sm:$0xff]
      %v1691 = vld [vmem:[%s9 + $0x8] sm:$0xff]
      %v1692 = vld [vmem:[%s9 + $0x10] sm:$0xff]
      %v1693 = vld [vmem:[%s9 + $0x18] sm:$0xff]
      %1694 = vrot.lane.b32.xlu0 %v1682, 17
      %v1695 = vpop.permute.xlu0 %1694
      %1696 = vrot.lane.b32.xlu0 %v1684, 17
      %v1697 = vpop.permute.xlu0 %1696
      %1698 = vrot.lane.b32.xlu0 %v1686, 17
      %v1699 = vpop.permute.xlu0 %1698
      %1700 = vrot.lane.b32.xlu0 %v1688, 17
      %v1701 = vpop.permute.xlu0 %1700
      %1702 = vrot.lane.b32.xlu0 %v1683, 17
      %v1703 = vpop.permute.xlu0 %1702
      %1704 = vrot.lane.b32.xlu0 %v1685, 17
      %v1705 = vpop.permute.xlu0 %1704
      %1706 = vrot.lane.b32.xlu0 %v1687, 17
      %v1707 = vpop.permute.xlu0 %1706
      %1708 = vrot.lane.b32.xlu0 %v1689, 17
      %v1709 = vpop.permute.xlu0 %1708
      %v1710 = vsel %vm414, %v1695, %v1703
      %v1711 = vsel %vm414, %v1697, %v1705
      %v1712 = vsel %vm414, %v1699, %v1707
      %v1713 = vsel %vm414, %v1701, %v1709
      %v1714 = vsel %vm414, %v1703, %v1695
      %v1715 = vsel %vm414, %v1705, %v1697
      %v1716 = vsel %vm414, %v1707, %v1699
      %v1717 = vsel %vm414, %v1709, %v1701
      %v1718 = vld [vmem:[%s2] sm:$0x3]
      %v1720 = vperm.slane %v1718, 0
      %v1721 = vperm.slane %v1718, 1
      %v1724 = vmul.f32 %v1714, %v1720
      %v1725 = vmul.f32 %v1710, %v1721
      %v1726 = vmul.f32 %v1715, %v1720
      %v1727 = vmul.f32 %v1711, %v1721
      %v1728 = vmul.f32 %v1716, %v1720
      %v1729 = vmul.f32 %v1712, %v1721
      %v1730 = vmul.f32 %v1717, %v1720
      %v1731 = vmul.f32 %v1713, %v1721
      %1733 = vset.pattern.permute.xlu0 0
      %1734 = vperm.xlu0 %1733, %v1690
      %v1735 = vpop.permute.xlu0 %1734
      %1738 = vset.pattern.permute.xlu0 0
      %1739 = vperm.xlu0 %1738, %v1691
      %v1740 = vpop.permute.xlu0 %1739
      %1743 = vset.pattern.permute.xlu0 0
      %1744 = vperm.xlu0 %1743, %v1692
      %v1745 = vpop.permute.xlu0 %1744
      %1748 = vset.pattern.permute.xlu0 0
      %1749 = vperm.xlu0 %1748, %v1693
      %v1750 = vpop.permute.xlu0 %1749
      %v1752 = vmul.f32 %v1735, %v1724
      %v1753 = vmul.f32 %v1735, %v1725
      %v1754 = vmul.f32 %v1740, %v1726
      %v1755 = vmul.f32 %v1740, %v1727
      %v1756 = vmul.f32 %v1745, %v1728
      %v1757 = vmul.f32 %v1745, %v1729
      %v1758 = vmul.f32 %v1750, %v1730
      %v1759 = vmul.f32 %v1750, %v1731
      %v1760 = vadd.f32 %v1752, 0.0
      %v1761 = vadd.f32 %v1753, 0.0
      %v1762 = vadd.f32 %v1754, 0.0
      %v1763 = vadd.f32 %v1755, 0.0
      %v1764 = vadd.f32 %v1756, 0.0
      %v1765 = vadd.f32 %v1757, 0.0
      %v1766 = vadd.f32 %v1758, 0.0
      %v1767 = vadd.f32 %v1759, 0.0
      %s1768 = scalar_lea.vmem %s9, 32
      %v1769 = vld [vmem:[%s1768] sm:$0xff]
      %v1770 = vld [vmem:[%s1768 + $0x8] sm:$0xff]
      %v1771 = vld [vmem:[%s1768 + $0x10] sm:$0xff]
      %v1772 = vld [vmem:[%s1768 + $0x18] sm:$0xff]
      %1773 = vrot.lane.b32.xlu0 %v1682, 16
      %v1774 = vpop.permute.xlu0 %1773
      %1775 = vrot.lane.b32.xlu0 %v1684, 16
      %v1776 = vpop.permute.xlu0 %1775
      %1777 = vrot.lane.b32.xlu0 %v1686, 16
      %v1778 = vpop.permute.xlu0 %1777
      %1779 = vrot.lane.b32.xlu0 %v1688, 16
      %v1780 = vpop.permute.xlu0 %1779
      %1781 = vrot.lane.b32.xlu0 %v1683, 16
      %v1782 = vpop.permute.xlu0 %1781
      %1783 = vrot.lane.b32.xlu0 %v1685, 16
      %v1784 = vpop.permute.xlu0 %1783
      %1785 = vrot.lane.b32.xlu0 %v1687, 16
      %v1786 = vpop.permute.xlu0 %1785
      %1787 = vrot.lane.b32.xlu0 %v1689, 16
      %v1788 = vpop.permute.xlu0 %1787
      %v1789 = vsel %vm468, %v1774, %v1782
      %v1790 = vsel %vm468, %v1776, %v1784
      %v1791 = vsel %vm468, %v1778, %v1786
      %v1792 = vsel %vm468, %v1780, %v1788
      %v1793 = vsel %vm468, %v1782, %v1774
      %v1794 = vsel %vm468, %v1784, %v1776
      %v1795 = vsel %vm468, %v1786, %v1778
      %v1796 = vsel %vm468, %v1788, %v1780
      %v1797 = vld [vmem:[%s471] sm:$0x3]
      %v1799 = vperm.slane %v1797, 0
      %v1800 = vperm.slane %v1797, 1
      %v1803 = vmul.f32 %v1793, %v1799
      %v1804 = vmul.f32 %v1789, %v1800
      %v1805 = vmul.f32 %v1794, %v1799
      %v1806 = vmul.f32 %v1790, %v1800
      %v1807 = vmul.f32 %v1795, %v1799
      %v1808 = vmul.f32 %v1791, %v1800
      %v1809 = vmul.f32 %v1796, %v1799
      %v1810 = vmul.f32 %v1792, %v1800
      %1812 = vset.pattern.permute.xlu0 0
      %1813 = vperm.xlu0 %1812, %v1769
      %v1814 = vpop.permute.xlu0 %1813
      %1817 = vset.pattern.permute.xlu0 0
      %1818 = vperm.xlu0 %1817, %v1770
      %v1819 = vpop.permute.xlu0 %1818
      %1822 = vset.pattern.permute.xlu0 0
      %1823 = vperm.xlu0 %1822, %v1771
      %v1824 = vpop.permute.xlu0 %1823
      %1827 = vset.pattern.permute.xlu0 0
      %1828 = vperm.xlu0 %1827, %v1772
      %v1829 = vpop.permute.xlu0 %1828
      %v1831 = vmul.f32 %v1814, %v1803
      %v1832 = vmul.f32 %v1814, %v1804
      %v1833 = vmul.f32 %v1819, %v1805
      %v1834 = vmul.f32 %v1819, %v1806
      %v1835 = vmul.f32 %v1824, %v1807
      %v1836 = vmul.f32 %v1824, %v1808
      %v1837 = vmul.f32 %v1829, %v1809
      %v1838 = vmul.f32 %v1829, %v1810
      %v1839 = vadd.f32 %v1760, %v1831
      %v1840 = vadd.f32 %v1761, %v1832
      %v1841 = vadd.f32 %v1762, %v1833
      %v1842 = vadd.f32 %v1763, %v1834
      %v1843 = vadd.f32 %v1764, %v1835
      %v1844 = vadd.f32 %v1765, %v1836
      %v1845 = vadd.f32 %v1766, %v1837
      %v1846 = vadd.f32 %v1767, %v1838
      %s1847 = scalar_lea.vmem %s9, 64
      %v1848 = vld [vmem:[%s1847] sm:$0xff]
      %v1849 = vld [vmem:[%s1847 + $0x8] sm:$0xff]
      %v1850 = vld [vmem:[%s1847 + $0x10] sm:$0xff]
      %v1851 = vld [vmem:[%s1847 + $0x18] sm:$0xff]
      %1852 = vrot.lane.b32.xlu0 %v1682, 15
      %v1853 = vpop.permute.xlu0 %1852
      %1854 = vrot.lane.b32.xlu0 %v1684, 15
      %v1855 = vpop.permute.xlu0 %1854
      %1856 = vrot.lane.b32.xlu0 %v1686, 15
      %v1857 = vpop.permute.xlu0 %1856
      %1858 = vrot.lane.b32.xlu0 %v1688, 15
      %v1859 = vpop.permute.xlu0 %1858
      %1860 = vrot.lane.b32.xlu0 %v1683, 15
      %v1861 = vpop.permute.xlu0 %1860
      %1862 = vrot.lane.b32.xlu0 %v1685, 15
      %v1863 = vpop.permute.xlu0 %1862
      %1864 = vrot.lane.b32.xlu0 %v1687, 15
      %v1865 = vpop.permute.xlu0 %1864
      %1866 = vrot.lane.b32.xlu0 %v1689, 15
      %v1867 = vpop.permute.xlu0 %1866
      %v1868 = vsel %vm514, %v1853, %v1861
      %v1869 = vsel %vm514, %v1855, %v1863
      %v1870 = vsel %vm514, %v1857, %v1865
      %v1871 = vsel %vm514, %v1859, %v1867
      %v1872 = vsel %vm514, %v1861, %v1853
      %v1873 = vsel %vm514, %v1863, %v1855
      %v1874 = vsel %vm514, %v1865, %v1857
      %v1875 = vsel %vm514, %v1867, %v1859
      %v1876 = vld [vmem:[%s517] sm:$0x3]
      %v1878 = vperm.slane %v1876, 0
      %v1879 = vperm.slane %v1876, 1
      %v1882 = vmul.f32 %v1872, %v1878
      %v1883 = vmul.f32 %v1868, %v1879
      %v1884 = vmul.f32 %v1873, %v1878
      %v1885 = vmul.f32 %v1869, %v1879
      %v1886 = vmul.f32 %v1874, %v1878
      %v1887 = vmul.f32 %v1870, %v1879
      %v1888 = vmul.f32 %v1875, %v1878
      %v1889 = vmul.f32 %v1871, %v1879
      %1891 = vset.pattern.permute.xlu0 0
      %1892 = vperm.xlu0 %1891, %v1848
      %v1893 = vpop.permute.xlu0 %1892
      %1896 = vset.pattern.permute.xlu0 0
      %1897 = vperm.xlu0 %1896, %v1849
      %v1898 = vpop.permute.xlu0 %1897
      %1901 = vset.pattern.permute.xlu0 0
      %1902 = vperm.xlu0 %1901, %v1850
      %v1903 = vpop.permute.xlu0 %1902
      %1906 = vset.pattern.permute.xlu0 0
      %1907 = vperm.xlu0 %1906, %v1851
      %v1908 = vpop.permute.xlu0 %1907
      %v1910 = vmul.f32 %v1893, %v1882
      %v1911 = vmul.f32 %v1893, %v1883
      %v1912 = vmul.f32 %v1898, %v1884
      %v1913 = vmul.f32 %v1898, %v1885
      %v1914 = vmul.f32 %v1903, %v1886
      %v1915 = vmul.f32 %v1903, %v1887
      %v1916 = vmul.f32 %v1908, %v1888
      %v1917 = vmul.f32 %v1908, %v1889
      %v1918 = vadd.f32 %v1839, %v1910
      %v1919 = vadd.f32 %v1840, %v1911
      %v1920 = vadd.f32 %v1841, %v1912
      %v1921 = vadd.f32 %v1842, %v1913
      %v1922 = vadd.f32 %v1843, %v1914
      %v1923 = vadd.f32 %v1844, %v1915
      %v1924 = vadd.f32 %v1845, %v1916
      %v1925 = vadd.f32 %v1846, %v1917
      %s1926 = scalar_lea.vmem %s9, 96
      %v1927 = vld [vmem:[%s1926] sm:$0xff]
      %v1928 = vld [vmem:[%s1926 + $0x8] sm:$0xff]
      %v1929 = vld [vmem:[%s1926 + $0x10] sm:$0xff]
      %v1930 = vld [vmem:[%s1926 + $0x18] sm:$0xff]
      %1931 = vrot.lane.b32.xlu0 %v1682, 1
      %v1932 = vpop.permute.xlu0 %1931
      %1933 = vrot.lane.b32.xlu0 %v1684, 1
      %v1934 = vpop.permute.xlu0 %1933
      %1935 = vrot.lane.b32.xlu0 %v1686, 1
      %v1936 = vpop.permute.xlu0 %1935
      %1937 = vrot.lane.b32.xlu0 %v1688, 1
      %v1938 = vpop.permute.xlu0 %1937
      %1939 = vrot.lane.b32.xlu0 %v1683, 1
      %v1940 = vpop.permute.xlu0 %1939
      %1941 = vrot.lane.b32.xlu0 %v1685, 1
      %v1942 = vpop.permute.xlu0 %1941
      %1943 = vrot.lane.b32.xlu0 %v1687, 1
      %v1944 = vpop.permute.xlu0 %1943
      %1945 = vrot.lane.b32.xlu0 %v1689, 1
      %v1946 = vpop.permute.xlu0 %1945
      %v1947 = vsel %vm560, %v1932, %v1940
      %v1948 = vsel %vm560, %v1934, %v1942
      %v1949 = vsel %vm560, %v1936, %v1944
      %v1950 = vsel %vm560, %v1938, %v1946
      %v1951 = vsel %vm560, %v1940, %v1932
      %v1952 = vsel %vm560, %v1942, %v1934
      %v1953 = vsel %vm560, %v1944, %v1936
      %v1954 = vsel %vm560, %v1946, %v1938
      %v1955 = vld [vmem:[%s563] sm:$0x3]
      %v1957 = vperm.slane %v1955, 0
      %v1958 = vperm.slane %v1955, 1
      %v1961 = vmul.f32 %v1951, %v1957
      %v1962 = vmul.f32 %v1947, %v1958
      %v1963 = vmul.f32 %v1952, %v1957
      %v1964 = vmul.f32 %v1948, %v1958
      %v1965 = vmul.f32 %v1953, %v1957
      %v1966 = vmul.f32 %v1949, %v1958
      %v1967 = vmul.f32 %v1954, %v1957
      %v1968 = vmul.f32 %v1950, %v1958
      %1970 = vset.pattern.permute.xlu0 0
      %1971 = vperm.xlu0 %1970, %v1927
      %v1972 = vpop.permute.xlu0 %1971
      %1975 = vset.pattern.permute.xlu0 0
      %1976 = vperm.xlu0 %1975, %v1928
      %v1977 = vpop.permute.xlu0 %1976
      %1980 = vset.pattern.permute.xlu0 0
      %1981 = vperm.xlu0 %1980, %v1929
      %v1982 = vpop.permute.xlu0 %1981
      %1985 = vset.pattern.permute.xlu0 0
      %1986 = vperm.xlu0 %1985, %v1930
      %v1987 = vpop.permute.xlu0 %1986
      %v1989 = vmul.f32 %v1972, %v1961
      %v1990 = vmul.f32 %v1972, %v1962
      %v1991 = vmul.f32 %v1977, %v1963
      %v1992 = vmul.f32 %v1977, %v1964
      %v1993 = vmul.f32 %v1982, %v1965
      %v1994 = vmul.f32 %v1982, %v1966
      %v1995 = vmul.f32 %v1987, %v1967
      %v1996 = vmul.f32 %v1987, %v1968
      %v1997 = vadd.f32 %v1918, %v1989
      %v1998 = vadd.f32 %v1919, %v1990
      %v1999 = vadd.f32 %v1920, %v1991
      %v2000 = vadd.f32 %v1921, %v1992
      %v2001 = vadd.f32 %v1922, %v1993
      %v2002 = vadd.f32 %v1923, %v1994
      %v2003 = vadd.f32 %v1924, %v1995
      %v2004 = vadd.f32 %v1925, %v1996
      %s2005 = scalar_lea.vmem %s9, 128
      %v2006 = vld [vmem:[%s2005] sm:$0xff]
      %v2007 = vld [vmem:[%s2005 + $0x8] sm:$0xff]
      %v2008 = vld [vmem:[%s2005 + $0x10] sm:$0xff]
      %v2009 = vld [vmem:[%s2005 + $0x18] sm:$0xff]
      %v2010 = vld [vmem:[%s602] sm:$0x3]
      %v2012 = vperm.slane %v2010, 0
      %v2013 = vperm.slane %v2010, 1
      %v2016 = vmul.f32 %v1682, %v2012
      %v2017 = vmul.f32 %v1683, %v2013
      %v2018 = vmul.f32 %v1684, %v2012
      %v2019 = vmul.f32 %v1685, %v2013
      %v2020 = vmul.f32 %v1686, %v2012
      %v2021 = vmul.f32 %v1687, %v2013
      %v2022 = vmul.f32 %v1688, %v2012
      %v2023 = vmul.f32 %v1689, %v2013
      %2025 = vset.pattern.permute.xlu0 0
      %2026 = vperm.xlu0 %2025, %v2006
      %v2027 = vpop.permute.xlu0 %2026
      %2030 = vset.pattern.permute.xlu0 0
      %2031 = vperm.xlu0 %2030, %v2007
      %v2032 = vpop.permute.xlu0 %2031
      %2035 = vset.pattern.permute.xlu0 0
      %2036 = vperm.xlu0 %2035, %v2008
      %v2037 = vpop.permute.xlu0 %2036
      %2040 = vset.pattern.permute.xlu0 0
      %2041 = vperm.xlu0 %2040, %v2009
      %v2042 = vpop.permute.xlu0 %2041
      %v2044 = vmul.f32 %v2027, %v2016
      %v2045 = vmul.f32 %v2027, %v2017
      %v2046 = vmul.f32 %v2032, %v2018
      %v2047 = vmul.f32 %v2032, %v2019
      %v2048 = vmul.f32 %v2037, %v2020
      %v2049 = vmul.f32 %v2037, %v2021
      %v2050 = vmul.f32 %v2042, %v2022
      %v2051 = vmul.f32 %v2042, %v2023
      %v2052 = vadd.f32 %v1997, %v2044
      %v2053 = vadd.f32 %v1998, %v2045
      %v2054 = vadd.f32 %v1999, %v2046
      %v2055 = vadd.f32 %v2000, %v2047
      %v2056 = vadd.f32 %v2001, %v2048
      %v2057 = vadd.f32 %v2002, %v2049
      %v2058 = vadd.f32 %v2003, %v2050
      %v2059 = vadd.f32 %v2004, %v2051
      %s2060 = scalar_lea.vmem %s9, 160
      %v2061 = vld [vmem:[%s2060] sm:$0xff]
      %v2062 = vld [vmem:[%s2060 + $0x8] sm:$0xff]
      %v2063 = vld [vmem:[%s2060 + $0x10] sm:$0xff]
      %v2064 = vld [vmem:[%s2060 + $0x18] sm:$0xff]
      %2065 = vrot.lane.b32.xlu0 %v1682, 127
      %v2066 = vpop.permute.xlu0 %2065
      %2067 = vrot.lane.b32.xlu0 %v1684, 127
      %v2068 = vpop.permute.xlu0 %2067
      %2069 = vrot.lane.b32.xlu0 %v1686, 127
      %v2070 = vpop.permute.xlu0 %2069
      %2071 = vrot.lane.b32.xlu0 %v1688, 127
      %v2072 = vpop.permute.xlu0 %2071
      %2073 = vrot.lane.b32.xlu0 %v1683, 127
      %v2074 = vpop.permute.xlu0 %2073
      %2075 = vrot.lane.b32.xlu0 %v1685, 127
      %v2076 = vpop.permute.xlu0 %2075
      %2077 = vrot.lane.b32.xlu0 %v1687, 127
      %v2078 = vpop.permute.xlu0 %2077
      %2079 = vrot.lane.b32.xlu0 %v1689, 127
      %v2080 = vpop.permute.xlu0 %2079
      %v2081 = vsel %vm617, %v2066, %v2074
      %v2082 = vsel %vm617, %v2068, %v2076
      %v2083 = vsel %vm617, %v2070, %v2078
      %v2084 = vsel %vm617, %v2072, %v2080
      %v2085 = vsel %vm617, %v2074, %v2066
      %v2086 = vsel %vm617, %v2076, %v2068
      %v2087 = vsel %vm617, %v2078, %v2070
      %v2088 = vsel %vm617, %v2080, %v2072
      %v2089 = vld [vmem:[%s620] sm:$0x3]
      %v2091 = vperm.slane %v2089, 0
      %v2092 = vperm.slane %v2089, 1
      %v2095 = vmul.f32 %v2081, %v2091
      %v2096 = vmul.f32 %v2085, %v2092
      %v2097 = vmul.f32 %v2082, %v2091
      %v2098 = vmul.f32 %v2086, %v2092
      %v2099 = vmul.f32 %v2083, %v2091
      %v2100 = vmul.f32 %v2087, %v2092
      %v2101 = vmul.f32 %v2084, %v2091
      %v2102 = vmul.f32 %v2088, %v2092
      %2104 = vset.pattern.permute.xlu0 0
      %2105 = vperm.xlu0 %2104, %v2061
      %v2106 = vpop.permute.xlu0 %2105
      %2109 = vset.pattern.permute.xlu0 0
      %2110 = vperm.xlu0 %2109, %v2062
      %v2111 = vpop.permute.xlu0 %2110
      %2114 = vset.pattern.permute.xlu0 0
      %2115 = vperm.xlu0 %2114, %v2063
      %v2116 = vpop.permute.xlu0 %2115
      %2119 = vset.pattern.permute.xlu0 0
      %2120 = vperm.xlu0 %2119, %v2064
      %v2121 = vpop.permute.xlu0 %2120
      %v2123 = vmul.f32 %v2106, %v2095
      %v2124 = vmul.f32 %v2106, %v2096
      %v2125 = vmul.f32 %v2111, %v2097
      %v2126 = vmul.f32 %v2111, %v2098
      %v2127 = vmul.f32 %v2116, %v2099
      %v2128 = vmul.f32 %v2116, %v2100
      %v2129 = vmul.f32 %v2121, %v2101
      %v2130 = vmul.f32 %v2121, %v2102
      %v2131 = vadd.f32 %v2052, %v2123
      %v2132 = vadd.f32 %v2053, %v2124
      %v2133 = vadd.f32 %v2054, %v2125
      %v2134 = vadd.f32 %v2055, %v2126
      %v2135 = vadd.f32 %v2056, %v2127
      %v2136 = vadd.f32 %v2057, %v2128
      %v2137 = vadd.f32 %v2058, %v2129
      %v2138 = vadd.f32 %v2059, %v2130
      %s2139 = scalar_lea.vmem %s9, 192
      %v2140 = vld [vmem:[%s2139] sm:$0xff]
      %v2141 = vld [vmem:[%s2139 + $0x8] sm:$0xff]
      %v2142 = vld [vmem:[%s2139 + $0x10] sm:$0xff]
      %v2143 = vld [vmem:[%s2139 + $0x18] sm:$0xff]
      %2144 = vrot.lane.b32.xlu0 %v1682, 113
      %v2145 = vpop.permute.xlu0 %2144
      %2146 = vrot.lane.b32.xlu0 %v1684, 113
      %v2147 = vpop.permute.xlu0 %2146
      %2148 = vrot.lane.b32.xlu0 %v1686, 113
      %v2149 = vpop.permute.xlu0 %2148
      %2150 = vrot.lane.b32.xlu0 %v1688, 113
      %v2151 = vpop.permute.xlu0 %2150
      %2152 = vrot.lane.b32.xlu0 %v1683, 113
      %v2153 = vpop.permute.xlu0 %2152
      %2154 = vrot.lane.b32.xlu0 %v1685, 113
      %v2155 = vpop.permute.xlu0 %2154
      %2156 = vrot.lane.b32.xlu0 %v1687, 113
      %v2157 = vpop.permute.xlu0 %2156
      %2158 = vrot.lane.b32.xlu0 %v1689, 113
      %v2159 = vpop.permute.xlu0 %2158
      %v2160 = vsel %vm663, %v2145, %v2153
      %v2161 = vsel %vm663, %v2147, %v2155
      %v2162 = vsel %vm663, %v2149, %v2157
      %v2163 = vsel %vm663, %v2151, %v2159
      %v2164 = vsel %vm663, %v2153, %v2145
      %v2165 = vsel %vm663, %v2155, %v2147
      %v2166 = vsel %vm663, %v2157, %v2149
      %v2167 = vsel %vm663, %v2159, %v2151
      %v2168 = vld [vmem:[%s666] sm:$0x3]
      %v2170 = vperm.slane %v2168, 0
      %v2171 = vperm.slane %v2168, 1
      %v2174 = vmul.f32 %v2160, %v2170
      %v2175 = vmul.f32 %v2164, %v2171
      %v2176 = vmul.f32 %v2161, %v2170
      %v2177 = vmul.f32 %v2165, %v2171
      %v2178 = vmul.f32 %v2162, %v2170
      %v2179 = vmul.f32 %v2166, %v2171
      %v2180 = vmul.f32 %v2163, %v2170
      %v2181 = vmul.f32 %v2167, %v2171
      %2183 = vset.pattern.permute.xlu0 0
      %2184 = vperm.xlu0 %2183, %v2140
      %v2185 = vpop.permute.xlu0 %2184
      %2188 = vset.pattern.permute.xlu0 0
      %2189 = vperm.xlu0 %2188, %v2141
      %v2190 = vpop.permute.xlu0 %2189
      %2193 = vset.pattern.permute.xlu0 0
      %2194 = vperm.xlu0 %2193, %v2142
      %v2195 = vpop.permute.xlu0 %2194
      %2198 = vset.pattern.permute.xlu0 0
      %2199 = vperm.xlu0 %2198, %v2143
      %v2200 = vpop.permute.xlu0 %2199
      %v2202 = vmul.f32 %v2185, %v2174
      %v2203 = vmul.f32 %v2185, %v2175
      %v2204 = vmul.f32 %v2190, %v2176
      %v2205 = vmul.f32 %v2190, %v2177
      %v2206 = vmul.f32 %v2195, %v2178
      %v2207 = vmul.f32 %v2195, %v2179
      %v2208 = vmul.f32 %v2200, %v2180
      %v2209 = vmul.f32 %v2200, %v2181
      %v2210 = vadd.f32 %v2131, %v2202
      %v2211 = vadd.f32 %v2132, %v2203
      %v2212 = vadd.f32 %v2133, %v2204
      %v2213 = vadd.f32 %v2134, %v2205
      %v2214 = vadd.f32 %v2135, %v2206
      %v2215 = vadd.f32 %v2136, %v2207
      %v2216 = vadd.f32 %v2137, %v2208
      %v2217 = vadd.f32 %v2138, %v2209
      %s2218 = scalar_lea.vmem %s9, 224
      %v2219 = vld [vmem:[%s2218] sm:$0xff]
      %v2220 = vld [vmem:[%s2218 + $0x8] sm:$0xff]
      %v2221 = vld [vmem:[%s2218 + $0x10] sm:$0xff]
      %v2222 = vld [vmem:[%s2218 + $0x18] sm:$0xff]
      %2223 = vrot.lane.b32.xlu0 %v1682, 112
      %v2224 = vpop.permute.xlu0 %2223
      %2225 = vrot.lane.b32.xlu0 %v1684, 112
      %v2226 = vpop.permute.xlu0 %2225
      %2227 = vrot.lane.b32.xlu0 %v1686, 112
      %v2228 = vpop.permute.xlu0 %2227
      %2229 = vrot.lane.b32.xlu0 %v1688, 112
      %v2230 = vpop.permute.xlu0 %2229
      %2231 = vrot.lane.b32.xlu0 %v1683, 112
      %v2232 = vpop.permute.xlu0 %2231
      %2233 = vrot.lane.b32.xlu0 %v1685, 112
      %v2234 = vpop.permute.xlu0 %2233
      %2235 = vrot.lane.b32.xlu0 %v1687, 112
      %v2236 = vpop.permute.xlu0 %2235
      %2237 = vrot.lane.b32.xlu0 %v1689, 112
      %v2238 = vpop.permute.xlu0 %2237
      %v2239 = vsel %vm709, %v2224, %v2232
      %v2240 = vsel %vm709, %v2226, %v2234
      %v2241 = vsel %vm709, %v2228, %v2236
      %v2242 = vsel %vm709, %v2230, %v2238
      %v2243 = vsel %vm709, %v2232, %v2224
      %v2244 = vsel %vm709, %v2234, %v2226
      %v2245 = vsel %vm709, %v2236, %v2228
      %v2246 = vsel %vm709, %v2238, %v2230
      %v2247 = vld [vmem:[%s712] sm:$0x3]
      %v2249 = vperm.slane %v2247, 0
      %v2250 = vperm.slane %v2247, 1
      %v2253 = vmul.f32 %v2239, %v2249
      %v2254 = vmul.f32 %v2243, %v2250
      %v2255 = vmul.f32 %v2240, %v2249
      %v2256 = vmul.f32 %v2244, %v2250
      %v2257 = vmul.f32 %v2241, %v2249
      %v2258 = vmul.f32 %v2245, %v2250
      %v2259 = vmul.f32 %v2242, %v2249
      %v2260 = vmul.f32 %v2246, %v2250
      %2262 = vset.pattern.permute.xlu0 0
      %2263 = vperm.xlu0 %2262, %v2219
      %v2264 = vpop.permute.xlu0 %2263
      %2267 = vset.pattern.permute.xlu0 0
      %2268 = vperm.xlu0 %2267, %v2220
      %v2269 = vpop.permute.xlu0 %2268
      %2272 = vset.pattern.permute.xlu0 0
      %2273 = vperm.xlu0 %2272, %v2221
      %v2274 = vpop.permute.xlu0 %2273
      %2277 = vset.pattern.permute.xlu0 0
      %2278 = vperm.xlu0 %2277, %v2222
      %v2279 = vpop.permute.xlu0 %2278
      %v2281 = vmul.f32 %v2264, %v2253
      %v2282 = vmul.f32 %v2264, %v2254
      %v2283 = vmul.f32 %v2269, %v2255
      %v2284 = vmul.f32 %v2269, %v2256
      %v2285 = vmul.f32 %v2274, %v2257
      %v2286 = vmul.f32 %v2274, %v2258
      %v2287 = vmul.f32 %v2279, %v2259
      %v2288 = vmul.f32 %v2279, %v2260
      %v2289 = vadd.f32 %v2210, %v2281
      %v2290 = vadd.f32 %v2211, %v2282
      %v2291 = vadd.f32 %v2212, %v2283
      %v2292 = vadd.f32 %v2213, %v2284
      %v2293 = vadd.f32 %v2214, %v2285
      %v2294 = vadd.f32 %v2215, %v2286
      %v2295 = vadd.f32 %v2216, %v2287
      %v2296 = vadd.f32 %v2217, %v2288
      %s2297 = scalar_lea.vmem %s9, 256
      %v2298 = vld [vmem:[%s2297] sm:$0xff]
      %v2299 = vld [vmem:[%s2297 + $0x8] sm:$0xff]
      %v2300 = vld [vmem:[%s2297 + $0x10] sm:$0xff]
      %v2301 = vld [vmem:[%s2297 + $0x18] sm:$0xff]
      %2302 = vrot.lane.b32.xlu0 %v1682, 111
      %v2303 = vpop.permute.xlu0 %2302
      %2304 = vrot.lane.b32.xlu0 %v1684, 111
      %v2305 = vpop.permute.xlu0 %2304
      %2306 = vrot.lane.b32.xlu0 %v1686, 111
      %v2307 = vpop.permute.xlu0 %2306
      %2308 = vrot.lane.b32.xlu0 %v1688, 111
      %v2309 = vpop.permute.xlu0 %2308
      %2310 = vrot.lane.b32.xlu0 %v1683, 111
      %v2311 = vpop.permute.xlu0 %2310
      %2312 = vrot.lane.b32.xlu0 %v1685, 111
      %v2313 = vpop.permute.xlu0 %2312
      %2314 = vrot.lane.b32.xlu0 %v1687, 111
      %v2315 = vpop.permute.xlu0 %2314
      %2316 = vrot.lane.b32.xlu0 %v1689, 111
      %v2317 = vpop.permute.xlu0 %2316
      %v2318 = vsel %vm755, %v2303, %v2311
      %v2319 = vsel %vm755, %v2305, %v2313
      %v2320 = vsel %vm755, %v2307, %v2315
      %v2321 = vsel %vm755, %v2309, %v2317
      %v2322 = vsel %vm755, %v2311, %v2303
      %v2323 = vsel %vm755, %v2313, %v2305
      %v2324 = vsel %vm755, %v2315, %v2307
      %v2325 = vsel %vm755, %v2317, %v2309
      %v2326 = vld [vmem:[%s758] sm:$0x3]
      %v2328 = vperm.slane %v2326, 0
      %v2329 = vperm.slane %v2326, 1
      %v2332 = vmul.f32 %v2318, %v2328
      %v2333 = vmul.f32 %v2322, %v2329
      %v2334 = vmul.f32 %v2319, %v2328
      %v2335 = vmul.f32 %v2323, %v2329
      %v2336 = vmul.f32 %v2320, %v2328
      %v2337 = vmul.f32 %v2324, %v2329
      %v2338 = vmul.f32 %v2321, %v2328
      %v2339 = vmul.f32 %v2325, %v2329
      %2341 = vset.pattern.permute.xlu0 0
      %2342 = vperm.xlu0 %2341, %v2298
      %v2343 = vpop.permute.xlu0 %2342
      %2346 = vset.pattern.permute.xlu0 0
      %2347 = vperm.xlu0 %2346, %v2299
      %v2348 = vpop.permute.xlu0 %2347
      %2351 = vset.pattern.permute.xlu0 0
      %2352 = vperm.xlu0 %2351, %v2300
      %v2353 = vpop.permute.xlu0 %2352
      %2356 = vset.pattern.permute.xlu0 0
      %2357 = vperm.xlu0 %2356, %v2301
      %v2358 = vpop.permute.xlu0 %2357
      %v2360 = vmul.f32 %v2343, %v2332
      %v2361 = vmul.f32 %v2343, %v2333
      %v2362 = vmul.f32 %v2348, %v2334
      %v2363 = vmul.f32 %v2348, %v2335
      %v2364 = vmul.f32 %v2353, %v2336
      %v2365 = vmul.f32 %v2353, %v2337
      %v2366 = vmul.f32 %v2358, %v2338
      %v2367 = vmul.f32 %v2358, %v2339
      %v2368 = vadd.f32 %v2289, %v2360
      %v2369 = vadd.f32 %v2290, %v2361
      %v2370 = vadd.f32 %v2291, %v2362
      %v2371 = vadd.f32 %v2292, %v2363
      %v2372 = vadd.f32 %v2293, %v2364
      %v2373 = vadd.f32 %v2294, %v2365
      %v2374 = vadd.f32 %v2295, %v2366
      %v2375 = vadd.f32 %v2296, %v2367
      %v2376 = vadd.f32 %v2368, %v2370
      %v2377 = vadd.f32 %v2376, %v2372
      %v2378 = vadd.f32 %v2377, %v2374
      %v2379 = vrot.slane %v2378, 4
      %v2380 = vadd.f32 %v2378, %v2379
      %v2381 = vrot.slane %v2380, 2
      %v2382 = vadd.f32 %v2380, %v2381
      %v2383 = vrot.slane %v2382, 1
      %v2384 = vadd.f32 %v2382, %v2383
      %v2385 = vadd.f32 %v2369, %v2371
      %v2386 = vadd.f32 %v2385, %v2373
      %v2387 = vadd.f32 %v2386, %v2375
      %v2388 = vrot.slane %v2387, 4
      %v2389 = vadd.f32 %v2387, %v2388
      %v2390 = vrot.slane %v2389, 2
      %v2391 = vadd.f32 %v2389, %v2390
      %v2392 = vrot.slane %v2391, 1
      %v2393 = vadd.f32 %v2391, %v2392
      %v2394 = vld [vmem:[#allocation4] sm:$0x1]
      %2396 = vset.pattern.permute.xlu0 0
      %2397 = vperm.xlu0 %2396, %v2394
      %v2398 = vpop.permute.xlu0 %2397
      %v2400 = vperm.slane %v2398, 0
      %v2401 = vadd.f32 %v2384, %v2400
      %v2402 = vadd.f32 %v2393, %v2400
      %v2405 = vrot.slane %v2402, 7
      %v2406 = vsel %vm428, %v2401, %v2405
      %v2408 = vadd.f32 %v401, %v2406
      %2409 = vst.msk [vmem:[%s400] sm:$0x3] %vm434, %v2408
      %p2410 = scmp.lt.s32.totalorder %s24, 1
      %s2411 = scalar_select %p2410, %s24, 1
      %s2412 = smul.addr %s2411, 2
      %s2413 = scalar_lea.vmem %s11, %s2412
      // Predicated region
      $region65: #{dualnet_forward.1} parent=63 // pred_check
        %p2414 = pneg %p283
      $region66: #{dualnet_forward.1} parent=63 // pred_check_branch
        %2416 = sbr.rel (%p2414) target = $region68
      $region67: #{dualnet_forward.1} parent=63 // pred_region
        _
      $region68: #{dualnet_forward.1} parent=63 // pred_fallthru
        _
    $region64: #{dualnet_forward.1} parent=5 // pred_fallthru
      _
    %p2417 = scmp.le.s32.totalorder 2, %s19
    // Predicated region
    $region69: #{dualnet_forward.1} parent=5 // pred_check
      %p2418 = pneg %p2417
    $region70: #{dualnet_forward.1} parent=5 // pred_check_branch
      %2420 = sbr.rel (%p2418) target = $region72
    $region71: #{dualnet_forward.1} parent=5 // pred_region
      %s2421 = ssub.s32 %s19, 2
      // Predicated region
      $region73: #{dualnet_forward.1} parent=71 // pred_check
        %p2422 = pneg %p289
      $region74: #{dualnet_forward.1} parent=71 // pred_check_branch
        %2424 = sbr.rel (%p2422) target = $region76
      $region75: #{dualnet_forward.1} parent=71 // pred_region
        %p2425 = scmp.lt.s32.totalorder %s25, 1
        %s2426 = scalar_select %p2425, %s25, 1
        %s2427 = smul.addr %s2426, 2
        %s2428 = scalar_lea.vmem %s11, %s2427
      $region76: #{dualnet_forward.1} parent=71 // pred_fallthru
        _
    $region72: #{dualnet_forward.1} parent=5 // pred_fallthru
      _
  $region6: #{dualnet_forward.1} parent=0 // loop_footer
    %s23 = sadd.s32 1, %s19
  $region7: #{dualnet_forward.1} parent=0 // loop_footer_branch
    %18 = sbr.rel target = $region3
  $region8: #{dualnet_forward.1} parent=0 // loop_exit
    _

</llo_original>
